<compile_context>
chip_gen: v5e
topology: v5e:2x2
jax: 0.10.0
libtpu: 0.0.40
codegen_flags: <defaults>
</compile_context>

<pallas_src>
import functools

import jax
import jax.numpy as jnp
from jax.experimental import pallas as pl
from jax.experimental.pallas import tpu as pltpu


def _layernorm(x, gamma, beta, eps=1e-5):
    # PyTorch nn.LayerNorm semantics: biased variance, eps inside sqrt.
    mean = jnp.mean(x, axis=-1, keepdims=True)
    var = jnp.mean((x - mean) ** 2, axis=-1, keepdims=True)
    return (x - mean) * jax.lax.rsqrt(var + eps) * gamma + beta


def encoder_layer_kernel(xq_ref, xkv_ref,
                         wq_ref, bq_ref, wkv_ref, bkv_ref,
                         wo_ref, bo_ref, g1_ref, be1_ref,
                         w1_ref, b1_ref, w2_ref, b2_ref,
                         g2_ref, be2_ref,
                         o_ref,
                         q_sc, m_sc, l_sc, acc_sc,
                         *, n_heads, compute_dtype):
    H = n_heads
    S, D = xq_ref.shape
    hd = D // H
    kv_idx = pl.program_id(1)
    nk = pl.num_programs(1)

    def mm(a, w):
        # MXU matmul, low-precision operands (optional), f32 accumulation.
        return jnp.dot(a.astype(compute_dtype), w.astype(compute_dtype),
                       preferred_element_type=jnp.float32)

    def split_heads(t):
        # (rows, D) -> (H, rows, hd): lane slices stacked along a NEW major axis
        # (major-axis concat only, no minor-dim transpose).
        rows = t.shape[0]
        return jnp.concatenate(
            [t[:, h * hd:(h + 1) * hd].reshape(1, rows, hd) for h in range(H)], axis=0)

    # ---- init (first kv tile of this sequence): Q projection + softmax state ----
    @pl.when(kv_idx == 0)
    def _():
        # 1/sqrt(D) already folded into wq/bq host-side.
        q = mm(xq_ref[...], wq_ref[...]) + bq_ref[...]          # (S, D), f32
        q_sc[...] = split_heads(q.astype(q_sc.dtype))           # (H, S, hd), cast once
        m_sc[...] = jnp.full(m_sc.shape, -jnp.inf, dtype=m_sc.dtype)
        l_sc[...] = jnp.zeros(l_sc.shape, dtype=l_sc.dtype)
        acc_sc[...] = jnp.zeros(acc_sc.shape, dtype=acc_sc.dtype)

    # ---- this kv tile: fused K/V projection + online-softmax update -------------
    kv = mm(xkv_ref[...], wkv_ref[...]) + bkv_ref[...]          # (tk, 2D), f32
    kv_c = kv.astype(compute_dtype)
    k_h = split_heads(kv_c[:, :D])                               # (H, tk, hd)
    v_h = split_heads(kv_c[:, D:])                               # (H, tk, hd)

    s = jnp.einsum('hqd,hkd->hqk', q_sc[...], k_h,
                   preferred_element_type=jnp.float32)           # (H, S, tk), f32
    m_prev = m_sc[...]
    m_new = jnp.maximum(m_prev, jnp.max(s, axis=-1, keepdims=True))
    alpha = jnp.exp(m_prev - m_new)
    p = jnp.exp(s - m_new)
    l_sc[...] = alpha * l_sc[...] + jnp.sum(p, axis=-1, keepdims=True)
    acc_sc[...] = alpha * acc_sc[...] + jnp.einsum(
        'hqk,hkd->hqd', p.astype(compute_dtype), v_h,
        preferred_element_type=jnp.float32)                      # (H, S, hd)
    m_sc[...] = m_new

    # ---- finalize (last kv tile): out-proj + LN1 + FFN + LN2 --------------------
    @pl.when(kv_idx == nk - 1)
    def _():
        if compute_dtype == jnp.float32:
            ctx = acc_sc[...] / l_sc[...]                        # exact divide on f32 path
        else:
            ctx = acc_sc[...] * pl.reciprocal(l_sc[...], approx=True)
        attn = jnp.concatenate([ctx[h] for h in range(H)], axis=-1)   # (S, D)
        x = xq_ref[...]
        attn_out = mm(attn, wo_ref[...]) + bo_ref[...]
        x1 = _layernorm(x + attn_out, g1_ref[...], be1_ref[...])
        h1 = jnp.maximum(mm(x1, w1_ref[...]) + b1_ref[...], 0.0)
        y = mm(h1, w2_ref[...]) + b2_ref[...]
        o_ref[...] = _layernorm(x1 + y, g2_ref[...], be2_ref[...]).astype(o_ref.dtype)


def prepare_params(params, *, compute_dtype=jnp.bfloat16, scale=None):
    """One-time, host-side parameter preparation (hoisted out of the per-call path)."""
    d_model = params["wq"].shape[0]
    scale = float(d_model) ** 0.5 if scale is None else float(scale)
    inv = 1.0 / scale
    wc = lambda w: w.astype(compute_dtype)
    return {
        # Fold 1/scale into Wq/bq in f32 BEFORE the low-precision cast.
        "wq": wc(params["wq"] * inv),
        "bq": params["bq"] * inv,
        # K and V fused into one (D, 2D) projection.
        "wkv": wc(jnp.concatenate([params["wk"], params["wv"]], axis=1)),
        "bkv": jnp.concatenate([params["bk"], params["bv"]], axis=1),
        "wo": wc(params["wo"]), "bo": params["bo"],
        "g1": params["g1"], "beta1": params["beta1"],
        "w1": wc(params["w1"]), "b1": params["b1"],
        "w2": wc(params["w2"]), "b2": params["b2"],
        "g2": params["g2"], "beta2": params["beta2"],
    }


def _vmem_limit_bytes():
    try:
        kind = jax.devices()[0].device_kind.lower()
    except Exception:
        kind = ""
    if "v7" in kind or "7x" in kind:
        return 48 * 1024 * 1024      # leave headroom under v7x's 64 MiB physical VMEM
    return 64 * 1024 * 1024          # v5e / v6e (128 MiB physical)


def transformer_encoder_layer(x, prep, *, n_heads, kv_tile=None):
    B, S, D = x.shape
    dff = prep["w1"].shape[1]
    compute_dtype = prep["wq"].dtype
    hd = D // n_heads
    assert hd * n_heads == D, "d_model must be divisible by n_heads"
    assert S % 8 == 0, "sequence length must be a multiple of 8 (sublane tile)"

    if kv_tile is None:
        kv_tile = S if S <= 128 else 128
    assert S % kv_tile == 0 and kv_tile % 8 == 0, "kv_tile must divide S and be a multiple of 8"
    nk = S // kv_tile

    x2 = x.reshape(B * S, D)

    def const_spec(shape):
        # Constant index_map -> block fetched once, stays VMEM-resident across the grid.
        return pl.BlockSpec(shape, lambda i, k: (0,) * len(shape))

    in_specs = [
        pl.BlockSpec((S, D), lambda i, k: (i, 0)),                    # query rows of batch i
        pl.BlockSpec((kv_tile, D), lambda i, k: (i * nk + k, 0)),     # kv-tile rows of batch i
        const_spec((D, D)), const_spec((1, D)),                       # Wq, bq (scale folded)
        const_spec((D, 2 * D)), const_spec((1, 2 * D)),               # fused Wkv, bkv
        const_spec((D, D)), const_spec((1, D)),                       # Wo, bo
        const_spec((1, D)), const_spec((1, D)),                       # norm1 gamma, beta
        const_spec((D, dff)), const_spec((1, dff)),                   # MLP W1, b1
        const_spec((dff, D)), const_spec((1, D)),                     # MLP W2, b2
        const_spec((1, D)), const_spec((1, D)),                       # norm2 gamma, beta
    ]

    kernel = functools.partial(encoder_layer_kernel,
                               n_heads=n_heads, compute_dtype=compute_dtype)

    out = pl.pallas_call(
        kernel,
        out_shape=jax.ShapeDtypeStruct((B * S, D), jnp.float32),
        grid=(B, nk),
        in_specs=in_specs,
        out_specs=pl.BlockSpec((S, D), lambda i, k: (i, 0)),
        scratch_shapes=[
            pltpu.VMEM((n_heads, S, hd), compute_dtype),   # cached per-head Q
            pltpu.VMEM((n_heads, S, 1), jnp.float32),      # running max
            pltpu.VMEM((n_heads, S, 1), jnp.float32),      # running denominator
            pltpu.VMEM((n_heads, S, hd), jnp.float32),     # output accumulator
        ],
        compiler_params=pltpu.CompilerParams(
            dimension_semantics=("parallel", "arbitrary"),
            vmem_limit_bytes=_vmem_limit_bytes()),
    )(x2, x2,
      prep["wq"], prep["bq"], prep["wkv"], prep["bkv"],
      prep["wo"], prep["bo"], prep["g1"], prep["beta1"],
      prep["w1"], prep["b1"], prep["w2"], prep["b2"],
      prep["g2"], prep["beta2"])
    return out.reshape(B, S, D)


def reference_forward(x, params, *, n_heads):
    """Pure-JAX reference mirroring the PyTorch forward (post-norm, no dropout, no mask)."""
    B, S, D = x.shape
    hd = D // n_heads
    scale = float(D) ** 0.5

    def linear(a, w, b):
        return a @ w + b

    q = linear(x, params["wq"], params["bq"]).reshape(B, S, n_heads, hd).transpose(0, 2, 1, 3)
    k = linear(x, params["wk"], params["bk"]).reshape(B, S, n_heads, hd).transpose(0, 2, 1, 3)
    v = linear(x, params["wv"], params["bv"]).reshape(B, S, n_heads, hd).transpose(0, 2, 1, 3)
    energy = jnp.einsum("bhqd,bhkd->bhqk", q, k) / scale
    attn = jax.nn.softmax(energy, axis=-1)
    o = jnp.einsum("bhqk,bhkd->bhqd", attn, v).transpose(0, 2, 1, 3).reshape(B, S, D)
    o = linear(o, params["wo"], params["bo"])
    x1 = _layernorm(x + o, params["g1"], params["beta1"])
    h1 = jnp.maximum(linear(x1, params["w1"], params["b1"]), 0.0)
    y = linear(h1, params["w2"], params["b2"])
    return _layernorm(x1 + y, params["g2"], params["beta2"])


def make_params(key, d_model, dim_feedforward):
    ks = jax.random.split(key, 12)
    s = 0.02
    return {
        "wq": jax.random.normal(ks[0], (d_model, d_model), jnp.float32) * s,
        "bq": jax.random.normal(ks[1], (1, d_model), jnp.float32) * s,
        "wk": jax.random.normal(ks[2], (d_model, d_model), jnp.float32) * s,
        "bk": jax.random.normal(ks[3], (1, d_model), jnp.float32) * s,
        "wv": jax.random.normal(ks[4], (d_model, d_model), jnp.float32) * s,
        "bv": jax.random.normal(ks[5], (1, d_model), jnp.float32) * s,
        "wo": jax.random.normal(ks[6], (d_model, d_model), jnp.float32) * s,
        "bo": jax.random.normal(ks[7], (1, d_model), jnp.float32) * s,
        "g1": jnp.ones((1, d_model), jnp.float32),
        "beta1": jnp.zeros((1, d_model), jnp.float32),
        "w1": jax.random.normal(ks[8], (d_model, dim_feedforward), jnp.float32) * s,
        "b1": jax.random.normal(ks[9], (1, dim_feedforward), jnp.float32) * s,
        "w2": jax.random.normal(ks[10], (dim_feedforward, d_model), jnp.float32) * s,
        "b2": jax.random.normal(ks[11], (1, d_model), jnp.float32) * s,
        "g2": jnp.ones((1, d_model), jnp.float32),
        "beta2": jnp.zeros((1, d_model), jnp.float32),
    }


if __name__ == "__main__":
    B, S, D, H, DFF = 2, 16, 32, 4, 64
    key = jax.random.PRNGKey(0)
    kx, kp = jax.random.split(key)
    x = jax.random.normal(kx, (B, S, D), jnp.float32)
    params = make_params(kp, D, DFF)

    ref = reference_forward(x, params, n_heads=H)

    # f32 MXU path (near-exact; kv_tile=8 -> 2 online-softmax steps per sequence).
    prep_f32 = prepare_params(params, compute_dtype=jnp.float32)
    out_f32 = jax.block_until_ready(
        transformer_encoder_layer(x, prep_f32, n_heads=H, kv_tile=8))
    assert out_f32.shape == (B, S, D)
    assert jnp.allclose(out_f32, ref, atol=1e-3, rtol=1e-3), "mismatch vs reference (f32)"

    # Default bf16 MXU path (v6e/v7x fast path) — looser tolerance for bf16 operands.
    prep_bf16 = prepare_params(params)                 # compute_dtype defaults to bf16
    out_bf16 = jax.block_until_ready(
        transformer_encoder_layer(x, prep_bf16, n_heads=H, kv_tile=8))
    assert jnp.allclose(out_bf16, ref, atol=5e-2, rtol=5e-2), "mismatch vs reference (bf16)"

    print("KERNEL_OK")
</pallas_src>

<mosaic_0001>
module attributes {stable_mosaic.version = 11 : i64} {
  func.func @encoder_layer_kernel(%arg0: i32, %arg1: i32, %arg2: memref<16x32xf32, #tpu.memory_space<vmem>>, %arg3: memref<8x32xf32, #tpu.memory_space<vmem>>, %arg4: memref<32x32xf32, #tpu.memory_space<vmem>>, %arg5: memref<1x32xf32, #tpu.memory_space<vmem>>, %arg6: memref<32x64xf32, #tpu.memory_space<vmem>>, %arg7: memref<1x64xf32, #tpu.memory_space<vmem>>, %arg8: memref<32x32xf32, #tpu.memory_space<vmem>>, %arg9: memref<1x32xf32, #tpu.memory_space<vmem>>, %arg10: memref<1x32xf32, #tpu.memory_space<vmem>>, %arg11: memref<1x32xf32, #tpu.memory_space<vmem>>, %arg12: memref<32x64xf32, #tpu.memory_space<vmem>>, %arg13: memref<1x64xf32, #tpu.memory_space<vmem>>, %arg14: memref<64x32xf32, #tpu.memory_space<vmem>>, %arg15: memref<1x32xf32, #tpu.memory_space<vmem>>, %arg16: memref<1x32xf32, #tpu.memory_space<vmem>>, %arg17: memref<1x32xf32, #tpu.memory_space<vmem>>, %arg18: memref<16x32xf32, #tpu.memory_space<vmem>>, %arg19: memref<4x16x8xf32, #tpu.memory_space<vmem>>, %arg20: memref<4x16x1xf32, #tpu.memory_space<vmem>>, %arg21: memref<4x16x1xf32, #tpu.memory_space<vmem>>, %arg22: memref<4x16x8xf32, #tpu.memory_space<vmem>>) attributes {dimension_semantics = [#tpu.dimension_semantics<parallel>, #tpu.dimension_semantics<arbitrary>], iteration_bounds = array<i64: 2, 2>, scalar_prefetch = 0 : i64, scratch_operands = 4 : i64, tpu.core_type = #tpu.core_type<tc>, window_params = [{transform_indices = @transform_0, window_bounds = array<i64: 16, 32>}, {transform_indices = @transform_1, window_bounds = array<i64: 8, 32>}, {pipeline_mode = #tpu.pipeline_mode<synchronous>, transform_indices = @transform_2, window_bounds = array<i64: 32, 32>}, {pipeline_mode = #tpu.pipeline_mode<synchronous>, transform_indices = @transform_3, window_bounds = array<i64: 1, 32>}, {pipeline_mode = #tpu.pipeline_mode<synchronous>, transform_indices = @transform_4, window_bounds = array<i64: 32, 64>}, {pipeline_mode = #tpu.pipeline_mode<synchronous>, transform_indices = @transform_5, window_bounds = array<i64: 1, 64>}, {pipeline_mode = #tpu.pipeline_mode<synchronous>, transform_indices = @transform_6, window_bounds = array<i64: 32, 32>}, {pipeline_mode = #tpu.pipeline_mode<synchronous>, transform_indices = @transform_7, window_bounds = array<i64: 1, 32>}, {pipeline_mode = #tpu.pipeline_mode<synchronous>, transform_indices = @transform_8, window_bounds = array<i64: 1, 32>}, {pipeline_mode = #tpu.pipeline_mode<synchronous>, transform_indices = @transform_9, window_bounds = array<i64: 1, 32>}, {pipeline_mode = #tpu.pipeline_mode<synchronous>, transform_indices = @transform_10, window_bounds = array<i64: 32, 64>}, {pipeline_mode = #tpu.pipeline_mode<synchronous>, transform_indices = @transform_11, window_bounds = array<i64: 1, 64>}, {pipeline_mode = #tpu.pipeline_mode<synchronous>, transform_indices = @transform_12, window_bounds = array<i64: 64, 32>}, {pipeline_mode = #tpu.pipeline_mode<synchronous>, transform_indices = @transform_13, window_bounds = array<i64: 1, 32>}, {pipeline_mode = #tpu.pipeline_mode<synchronous>, transform_indices = @transform_14, window_bounds = array<i64: 1, 32>}, {pipeline_mode = #tpu.pipeline_mode<synchronous>, transform_indices = @transform_15, window_bounds = array<i64: 1, 32>}, {transform_indices = @transform_16, window_bounds = array<i64: 16, 32>}]} {
    %c0_i32 = arith.constant 0 : i32
    %0 = arith.cmpi eq, %arg1, %c0_i32 : i32
    %1 = arith.extui %0 : i1 to i32
    %c0_i32_0 = arith.constant 0 : i32
    %2 = arith.cmpi ne, %1, %c0_i32_0 : i32
    scf.if %2 {
      %c0_32 = arith.constant 0 : index
      %c0_33 = arith.constant 0 : index
      %56 = vector.load %arg2[%c0_32, %c0_33] : memref<16x32xf32, #tpu.memory_space<vmem>>, vector<16x32xf32>
      %c0_34 = arith.constant 0 : index
      %c0_35 = arith.constant 0 : index
      %57 = vector.load %arg4[%c0_34, %c0_35] : memref<32x32xf32, #tpu.memory_space<vmem>>, vector<32x32xf32>
      %cst_36 = arith.constant dense<0.000000e+00> : vector<16x32xf32>
      %58 = tpu.matmul %56, %57, %cst_36 {dimension_numbers = #tpu.dot_dimension_numbers<[1], [0], [0], [1], [0, 0, 1, 1], [], []>} : vector<16x32xf32>, vector<32x32xf32>, vector<16x32xf32> -> vector<16x32xf32>
      %c0_37 = arith.constant 0 : index
      %c0_38 = arith.constant 0 : index
      %59 = vector.load %arg5[%c0_37, %c0_38] : memref<1x32xf32, #tpu.memory_space<vmem>>, vector<1x32xf32>
      %60 = vector.broadcast %59 : vector<1x32xf32> to vector<16x32xf32>
      %61 = arith.addf %58, %60 : vector<16x32xf32>
      %62 = vector.extract_strided_slice %61 {offsets = [0, 0], sizes = [16, 8], strides = [1, 1]} : vector<16x32xf32> to vector<16x8xf32>
      %63 = vector.shape_cast %62 : vector<16x8xf32> to vector<1x16x8xf32>
      %64 = vector.extract_strided_slice %61 {offsets = [0, 8], sizes = [16, 8], strides = [1, 1]} : vector<16x32xf32> to vector<16x8xf32>
      %65 = vector.shape_cast %64 : vector<16x8xf32> to vector<1x16x8xf32>
      %66 = vector.extract_strided_slice %61 {offsets = [0, 16], sizes = [16, 8], strides = [1, 1]} : vector<16x32xf32> to vector<16x8xf32>
      %67 = vector.shape_cast %66 : vector<16x8xf32> to vector<1x16x8xf32>
      %68 = vector.extract_strided_slice %61 {offsets = [0, 24], sizes = [16, 8], strides = [1, 1]} : vector<16x32xf32> to vector<16x8xf32>
      %69 = vector.shape_cast %68 : vector<16x8xf32> to vector<1x16x8xf32>
      %70 = tpu.concatenate %63, %65, %67, %69 in 0 : vector<1x16x8xf32>, vector<1x16x8xf32>, vector<1x16x8xf32>, vector<1x16x8xf32> -> vector<4x16x8xf32>
      %c0_39 = arith.constant 0 : index
      %c0_40 = arith.constant 0 : index
      %c0_41 = arith.constant 0 : index
      %71 = vector.load %arg19[%c0_39, %c0_40, %c0_41] : memref<4x16x8xf32, #tpu.memory_space<vmem>>, vector<4x16x8xf32>
      tpu.vector_store %arg19[%c0_39, %c0_40, %c0_41], %70 {strides = array<i32>} : memref<4x16x8xf32, #tpu.memory_space<vmem>>, vector<4x16x8xf32>,
      %cst_42 = arith.constant 0xFF800000 : f32
      %72 = vector.broadcast %cst_42 : f32 to vector<4x16x1xf32>
      %c0_43 = arith.constant 0 : index
      %c0_44 = arith.constant 0 : index
      %c0_45 = arith.constant 0 : index
      %73 = vector.load %arg20[%c0_43, %c0_44, %c0_45] : memref<4x16x1xf32, #tpu.memory_space<vmem>>, vector<4x16x1xf32>
      tpu.vector_store %arg20[%c0_43, %c0_44, %c0_45], %72 {strides = array<i32>} : memref<4x16x1xf32, #tpu.memory_space<vmem>>, vector<4x16x1xf32>,
      %cst_46 = arith.constant 0.000000e+00 : f32
      %74 = vector.broadcast %cst_46 : f32 to vector<4x16x1xf32>
      %c0_47 = arith.constant 0 : index
      %c0_48 = arith.constant 0 : index
      %c0_49 = arith.constant 0 : index
      %75 = vector.load %arg21[%c0_47, %c0_48, %c0_49] : memref<4x16x1xf32, #tpu.memory_space<vmem>>, vector<4x16x1xf32>
      tpu.vector_store %arg21[%c0_47, %c0_48, %c0_49], %74 {strides = array<i32>} : memref<4x16x1xf32, #tpu.memory_space<vmem>>, vector<4x16x1xf32>,
      %cst_50 = arith.constant 0.000000e+00 : f32
      %76 = vector.broadcast %cst_50 : f32 to vector<4x16x8xf32>
      %c0_51 = arith.constant 0 : index
      %c0_52 = arith.constant 0 : index
      %c0_53 = arith.constant 0 : index
      %77 = vector.load %arg22[%c0_51, %c0_52, %c0_53] : memref<4x16x8xf32, #tpu.memory_space<vmem>>, vector<4x16x8xf32>
      tpu.vector_store %arg22[%c0_51, %c0_52, %c0_53], %76 {strides = array<i32>} : memref<4x16x8xf32, #tpu.memory_space<vmem>>, vector<4x16x8xf32>,
    } else {
    }
    %c0 = arith.constant 0 : index
    %c0_1 = arith.constant 0 : index
    %3 = vector.load %arg3[%c0, %c0_1] : memref<8x32xf32, #tpu.memory_space<vmem>>, vector<8x32xf32>
    %c0_2 = arith.constant 0 : index
    %c0_3 = arith.constant 0 : index
    %4 = vector.load %arg6[%c0_2, %c0_3] : memref<32x64xf32, #tpu.memory_space<vmem>>, vector<32x64xf32>
    %cst = arith.constant dense<0.000000e+00> : vector<8x64xf32>
    %5 = tpu.matmul %3, %4, %cst {dimension_numbers = #tpu.dot_dimension_numbers<[1], [0], [0], [1], [0, 0, 1, 1], [], []>} : vector<8x32xf32>, vector<32x64xf32>, vector<8x64xf32> -> vector<8x64xf32>
    %c0_4 = arith.constant 0 : index
    %c0_5 = arith.constant 0 : index
    %6 = vector.load %arg7[%c0_4, %c0_5] : memref<1x64xf32, #tpu.memory_space<vmem>>, vector<1x64xf32>
    %7 = vector.broadcast %6 : vector<1x64xf32> to vector<8x64xf32>
    %8 = arith.addf %5, %7 : vector<8x64xf32>
    %9 = vector.extract_strided_slice %8 {offsets = [0, 0], sizes = [8, 32], strides = [1, 1]} : vector<8x64xf32> to vector<8x32xf32>
    %10 = vector.extract_strided_slice %9 {offsets = [0, 0], sizes = [8, 8], strides = [1, 1]} : vector<8x32xf32> to vector<8x8xf32>
    %11 = vector.shape_cast %10 : vector<8x8xf32> to vector<1x8x8xf32>
    %12 = vector.extract_strided_slice %9 {offsets = [0, 8], sizes = [8, 8], strides = [1, 1]} : vector<8x32xf32> to vector<8x8xf32>
    %13 = vector.shape_cast %12 : vector<8x8xf32> to vector<1x8x8xf32>
    %14 = vector.extract_strided_slice %9 {offsets = [0, 16], sizes = [8, 8], strides = [1, 1]} : vector<8x32xf32> to vector<8x8xf32>
    %15 = vector.shape_cast %14 : vector<8x8xf32> to vector<1x8x8xf32>
    %16 = vector.extract_strided_slice %9 {offsets = [0, 24], sizes = [8, 8], strides = [1, 1]} : vector<8x32xf32> to vector<8x8xf32>
    %17 = vector.shape_cast %16 : vector<8x8xf32> to vector<1x8x8xf32>
    %18 = tpu.concatenate %11, %13, %15, %17 in 0 : vector<1x8x8xf32>, vector<1x8x8xf32>, vector<1x8x8xf32>, vector<1x8x8xf32> -> vector<4x8x8xf32>
    %19 = vector.extract_strided_slice %8 {offsets = [0, 32], sizes = [8, 32], strides = [1, 1]} : vector<8x64xf32> to vector<8x32xf32>
    %20 = vector.extract_strided_slice %19 {offsets = [0, 0], sizes = [8, 8], strides = [1, 1]} : vector<8x32xf32> to vector<8x8xf32>
    %21 = vector.shape_cast %20 : vector<8x8xf32> to vector<1x8x8xf32>
    %22 = vector.extract_strided_slice %19 {offsets = [0, 8], sizes = [8, 8], strides = [1, 1]} : vector<8x32xf32> to vector<8x8xf32>
    %23 = vector.shape_cast %22 : vector<8x8xf32> to vector<1x8x8xf32>
    %24 = vector.extract_strided_slice %19 {offsets = [0, 16], sizes = [8, 8], strides = [1, 1]} : vector<8x32xf32> to vector<8x8xf32>
    %25 = vector.shape_cast %24 : vector<8x8xf32> to vector<1x8x8xf32>
    %26 = vector.extract_strided_slice %19 {offsets = [0, 24], sizes = [8, 8], strides = [1, 1]} : vector<8x32xf32> to vector<8x8xf32>
    %27 = vector.shape_cast %26 : vector<8x8xf32> to vector<1x8x8xf32>
    %28 = tpu.concatenate %21, %23, %25, %27 in 0 : vector<1x8x8xf32>, vector<1x8x8xf32>, vector<1x8x8xf32>, vector<1x8x8xf32> -> vector<4x8x8xf32>
    %c0_6 = arith.constant 0 : index
    %c0_7 = arith.constant 0 : index
    %c0_8 = arith.constant 0 : index
    %29 = vector.load %arg19[%c0_6, %c0_7, %c0_8] : memref<4x16x8xf32, #tpu.memory_space<vmem>>, vector<4x16x8xf32>
    "tpu.trace_start"() <{level = 10 : i32, message = "hqd,hkd->hqk"}> : () -> ()
    %cst_9 = arith.constant dense<0.000000e+00> : vector<4x16x8xf32>
    %30 = tpu.matmul %29, %18, %cst_9 {dimension_numbers = #tpu.dot_dimension_numbers<[2], [2], [1], [1], [0, 0, 0, 1, 1, 1], [0], [0]>} : vector<4x16x8xf32>, vector<4x8x8xf32>, vector<4x16x8xf32> -> vector<4x16x8xf32>
    "tpu.trace_stop"() : () -> ()
    %c0_10 = arith.constant 0 : index
    %c0_11 = arith.constant 0 : index
    %c0_12 = arith.constant 0 : index
    %31 = vector.load %arg20[%c0_10, %c0_11, %c0_12] : memref<4x16x1xf32, #tpu.memory_space<vmem>>, vector<4x16x1xf32>
    %cst_13 = arith.constant dense<0xFF800000> : vector<4x16xf32>
    %32 = vector.multi_reduction <maximumf>, %30, %cst_13 [2] : vector<4x16x8xf32> to vector<4x16xf32>
    %33 = vector.shape_cast %32 : vector<4x16xf32> to vector<4x16x1xf32>
    %34 = arith.maximumf %31, %33 : vector<4x16x1xf32>
    %35 = arith.subf %31, %34 : vector<4x16x1xf32>
    %36 = math.exp %35 : vector<4x16x1xf32>
    %37 = vector.broadcast %34 : vector<4x16x1xf32> to vector<4x16x8xf32>
    %38 = arith.subf %30, %37 : vector<4x16x8xf32>
    %39 = math.exp %38 : vector<4x16x8xf32>
    %c0_14 = arith.constant 0 : index
    %c0_15 = arith.constant 0 : index
    %c0_16 = arith.constant 0 : index
    %40 = vector.load %arg21[%c0_14, %c0_15, %c0_16] : memref<4x16x1xf32, #tpu.memory_space<vmem>>, vector<4x16x1xf32>
    %41 = arith.mulf %36, %40 : vector<4x16x1xf32>
    %cst_17 = arith.constant dense<0.000000e+00> : vector<4x16xf32>
    %42 = vector.multi_reduction <add>, %39, %cst_17 [2] : vector<4x16x8xf32> to vector<4x16xf32>
    %43 = vector.shape_cast %42 : vector<4x16xf32> to vector<4x16x1xf32>
    %44 = arith.addf %41, %43 : vector<4x16x1xf32>
    %c0_18 = arith.constant 0 : index
    %c0_19 = arith.constant 0 : index
    %c0_20 = arith.constant 0 : index
    %45 = vector.load %arg21[%c0_18, %c0_19, %c0_20] : memref<4x16x1xf32, #tpu.memory_space<vmem>>, vector<4x16x1xf32>
    tpu.vector_store %arg21[%c0_18, %c0_19, %c0_20], %44 {strides = array<i32>} : memref<4x16x1xf32, #tpu.memory_space<vmem>>, vector<4x16x1xf32>,
    %c0_21 = arith.constant 0 : index
    %c0_22 = arith.constant 0 : index
    %c0_23 = arith.constant 0 : index
    %46 = vector.load %arg22[%c0_21, %c0_22, %c0_23] : memref<4x16x8xf32, #tpu.memory_space<vmem>>, vector<4x16x8xf32>
    %47 = vector.broadcast %36 : vector<4x16x1xf32> to vector<4x16x8xf32>
    %48 = arith.mulf %47, %46 : vector<4x16x8xf32>
    "tpu.trace_start"() <{level = 10 : i32, message = "hqk,hkd->hqd"}> : () -> ()
    %cst_24 = arith.constant dense<0.000000e+00> : vector<4x16x8xf32>
    %49 = tpu.matmul %39, %28, %cst_24 {dimension_numbers = #tpu.dot_dimension_numbers<[2], [1], [1], [2], [0, 0, 0, 1, 1, 2], [0], [0]>} : vector<4x16x8xf32>, vector<4x8x8xf32>, vector<4x16x8xf32> -> vector<4x16x8xf32>
    "tpu.trace_stop"() : () -> ()
    %50 = arith.addf %48, %49 : vector<4x16x8xf32>
    %c0_25 = arith.constant 0 : index
    %c0_26 = arith.constant 0 : index
    %c0_27 = arith.constant 0 : index
    %51 = vector.load %arg22[%c0_25, %c0_26, %c0_27] : memref<4x16x8xf32, #tpu.memory_space<vmem>>, vector<4x16x8xf32>
    tpu.vector_store %arg22[%c0_25, %c0_26, %c0_27], %50 {strides = array<i32>} : memref<4x16x8xf32, #tpu.memory_space<vmem>>, vector<4x16x8xf32>,
    %c0_28 = arith.constant 0 : index
    %c0_29 = arith.constant 0 : index
    %c0_30 = arith.constant 0 : index
    %52 = vector.load %arg20[%c0_28, %c0_29, %c0_30] : memref<4x16x1xf32, #tpu.memory_space<vmem>>, vector<4x16x1xf32>
    tpu.vector_store %arg20[%c0_28, %c0_29, %c0_30], %34 {strides = array<i32>} : memref<4x16x1xf32, #tpu.memory_space<vmem>>, vector<4x16x1xf32>,
    %c1_i32 = arith.constant 1 : i32
    %53 = arith.cmpi eq, %arg1, %c1_i32 : i32
    %54 = arith.extui %53 : i1 to i32
    %c0_i32_31 = arith.constant 0 : i32
    %55 = arith.cmpi ne, %54, %c0_i32_31 : i32
    scf.if %55 {
      %c0_32 = arith.constant 0 : index
      %c0_33 = arith.constant 0 : index
      %c0_34 = arith.constant 0 : index
      %56 = vector.load %arg22[%c0_32, %c0_33, %c0_34] : memref<4x16x8xf32, #tpu.memory_space<vmem>>, vector<4x16x8xf32>
      %c0_35 = arith.constant 0 : index
      %c0_36 = arith.constant 0 : index
      %c0_37 = arith.constant 0 : index
      %57 = vector.load %arg21[%c0_35, %c0_36, %c0_37] : memref<4x16x1xf32, #tpu.memory_space<vmem>>, vector<4x16x1xf32>
      %58 = vector.broadcast %57 : vector<4x16x1xf32> to vector<4x16x8xf32>
      %59 = arith.divf %56, %58 : vector<4x16x8xf32>
      %60 = vector.extract_strided_slice %59 {offsets = [0, 0, 0], sizes = [1, 16, 8], strides = [1, 1, 1]} : vector<4x16x8xf32> to vector<1x16x8xf32>
      %61 = vector.shape_cast %60 : vector<1x16x8xf32> to vector<16x8xf32>
      %62 = vector.extract_strided_slice %59 {offsets = [1, 0, 0], sizes = [1, 16, 8], strides = [1, 1, 1]} : vector<4x16x8xf32> to vector<1x16x8xf32>
      %63 = vector.shape_cast %62 : vector<1x16x8xf32> to vector<16x8xf32>
      %64 = vector.extract_strided_slice %59 {offsets = [2, 0, 0], sizes = [1, 16, 8], strides = [1, 1, 1]} : vector<4x16x8xf32> to vector<1x16x8xf32>
      %65 = vector.shape_cast %64 : vector<1x16x8xf32> to vector<16x8xf32>
      %66 = vector.extract_strided_slice %59 {offsets = [3, 0, 0], sizes = [1, 16, 8], strides = [1, 1, 1]} : vector<4x16x8xf32> to vector<1x16x8xf32>
      %67 = vector.shape_cast %66 : vector<1x16x8xf32> to vector<16x8xf32>
      %68 = tpu.concatenate %61, %63, %65, %67 in 1 : vector<16x8xf32>, vector<16x8xf32>, vector<16x8xf32>, vector<16x8xf32> -> vector<16x32xf32>
      %c0_38 = arith.constant 0 : index
      %c0_39 = arith.constant 0 : index
      %69 = vector.load %arg2[%c0_38, %c0_39] : memref<16x32xf32, #tpu.memory_space<vmem>>, vector<16x32xf32>
      %c0_40 = arith.constant 0 : index
      %c0_41 = arith.constant 0 : index
      %70 = vector.load %arg8[%c0_40, %c0_41] : memref<32x32xf32, #tpu.memory_space<vmem>>, vector<32x32xf32>
      %cst_42 = arith.constant dense<0.000000e+00> : vector<16x32xf32>
      %71 = tpu.matmul %68, %70, %cst_42 {dimension_numbers = #tpu.dot_dimension_numbers<[1], [0], [0], [1], [0, 0, 1, 1], [], []>} : vector<16x32xf32>, vector<32x32xf32>, vector<16x32xf32> -> vector<16x32xf32>
      %c0_43 = arith.constant 0 : index
      %c0_44 = arith.constant 0 : index
      %72 = vector.load %arg9[%c0_43, %c0_44] : memref<1x32xf32, #tpu.memory_space<vmem>>, vector<1x32xf32>
      %73 = vector.broadcast %72 : vector<1x32xf32> to vector<16x32xf32>
      %74 = arith.addf %71, %73 : vector<16x32xf32>
      %75 = arith.addf %69, %74 : vector<16x32xf32>
      %c0_45 = arith.constant 0 : index
      %c0_46 = arith.constant 0 : index
      %76 = vector.load %arg10[%c0_45, %c0_46] : memref<1x32xf32, #tpu.memory_space<vmem>>, vector<1x32xf32>
      %c0_47 = arith.constant 0 : index
      %c0_48 = arith.constant 0 : index
      %77 = vector.load %arg11[%c0_47, %c0_48] : memref<1x32xf32, #tpu.memory_space<vmem>>, vector<1x32xf32>
      %cst_49 = arith.constant dense<0.000000e+00> : vector<16xf32>
      %78 = vector.multi_reduction <add>, %75, %cst_49 [1] : vector<16x32xf32> to vector<16xf32>
      %79 = vector.shape_cast %78 : vector<16xf32> to vector<16x1xf32>
      %cst_50 = arith.constant 3.200000e+01 : f32
      %80 = vector.broadcast %cst_50 : f32 to vector<16x1xf32>
      %81 = arith.divf %79, %80 : vector<16x1xf32>
      %82 = vector.broadcast %81 : vector<16x1xf32> to vector<16x32xf32>
      %83 = arith.subf %75, %82 : vector<16x32xf32>
      %84 = arith.mulf %83, %83 : vector<16x32xf32>
      %cst_51 = arith.constant dense<0.000000e+00> : vector<16xf32>
      %85 = vector.multi_reduction <add>, %84, %cst_51 [1] : vector<16x32xf32> to vector<16xf32>
      %86 = vector.shape_cast %85 : vector<16xf32> to vector<16x1xf32>
      %cst_52 = arith.constant 3.200000e+01 : f32
      %87 = vector.broadcast %cst_52 : f32 to vector<16x1xf32>
      %88 = arith.divf %86, %87 : vector<16x1xf32>
      %89 = vector.broadcast %81 : vector<16x1xf32> to vector<16x32xf32>
      %90 = arith.subf %75, %89 : vector<16x32xf32>
      %cst_53 = arith.constant 9.99999974E-6 : f32
      %91 = vector.broadcast %cst_53 : f32 to vector<16x1xf32>
      %92 = arith.addf %88, %91 : vector<16x1xf32>
      %93 = math.rsqrt %92 : vector<16x1xf32>
      %94 = vector.broadcast %93 : vector<16x1xf32> to vector<16x32xf32>
      %95 = arith.mulf %90, %94 : vector<16x32xf32>
      %96 = vector.broadcast %76 : vector<1x32xf32> to vector<16x32xf32>
      %97 = arith.mulf %95, %96 : vector<16x32xf32>
      %98 = vector.broadcast %77 : vector<1x32xf32> to vector<16x32xf32>
      %99 = arith.addf %97, %98 : vector<16x32xf32>
      %c0_54 = arith.constant 0 : index
      %c0_55 = arith.constant 0 : index
      %100 = vector.load %arg12[%c0_54, %c0_55] : memref<32x64xf32, #tpu.memory_space<vmem>>, vector<32x64xf32>
      %cst_56 = arith.constant dense<0.000000e+00> : vector<16x64xf32>
      %101 = tpu.matmul %99, %100, %cst_56 {dimension_numbers = #tpu.dot_dimension_numbers<[1], [0], [0], [1], [0, 0, 1, 1], [], []>} : vector<16x32xf32>, vector<32x64xf32>, vector<16x64xf32> -> vector<16x64xf32>
      %c0_57 = arith.constant 0 : index
      %c0_58 = arith.constant 0 : index
      %102 = vector.load %arg13[%c0_57, %c0_58] : memref<1x64xf32, #tpu.memory_space<vmem>>, vector<1x64xf32>
      %103 = vector.broadcast %102 : vector<1x64xf32> to vector<16x64xf32>
      %104 = arith.addf %101, %103 : vector<16x64xf32>
      %cst_59 = arith.constant 0.000000e+00 : f32
      %105 = vector.broadcast %cst_59 : f32 to vector<16x64xf32>
      %106 = arith.maximumf %104, %105 : vector<16x64xf32>
      %c0_60 = arith.constant 0 : index
      %c0_61 = arith.constant 0 : index
      %107 = vector.load %arg14[%c0_60, %c0_61] : memref<64x32xf32, #tpu.memory_space<vmem>>, vector<64x32xf32>
      %cst_62 = arith.constant dense<0.000000e+00> : vector<16x32xf32>
      %108 = tpu.matmul %106, %107, %cst_62 {dimension_numbers = #tpu.dot_dimension_numbers<[1], [0], [0], [1], [0, 0, 1, 1], [], []>} : vector<16x64xf32>, vector<64x32xf32>, vector<16x32xf32> -> vector<16x32xf32>
      %c0_63 = arith.constant 0 : index
      %c0_64 = arith.constant 0 : index
      %109 = vector.load %arg15[%c0_63, %c0_64] : memref<1x32xf32, #tpu.memory_space<vmem>>, vector<1x32xf32>
      %110 = vector.broadcast %109 : vector<1x32xf32> to vector<16x32xf32>
      %111 = arith.addf %108, %110 : vector<16x32xf32>
      %112 = arith.addf %99, %111 : vector<16x32xf32>
      %c0_65 = arith.constant 0 : index
      %c0_66 = arith.constant 0 : index
      %113 = vector.load %arg16[%c0_65, %c0_66] : memref<1x32xf32, #tpu.memory_space<vmem>>, vector<1x32xf32>
      %c0_67 = arith.constant 0 : index
      %c0_68 = arith.constant 0 : index
      %114 = vector.load %arg17[%c0_67, %c0_68] : memref<1x32xf32, #tpu.memory_space<vmem>>, vector<1x32xf32>
      %cst_69 = arith.constant dense<0.000000e+00> : vector<16xf32>
      %115 = vector.multi_reduction <add>, %112, %cst_69 [1] : vector<16x32xf32> to vector<16xf32>
      %116 = vector.shape_cast %115 : vector<16xf32> to vector<16x1xf32>
      %cst_70 = arith.constant 3.200000e+01 : f32
      %117 = vector.broadcast %cst_70 : f32 to vector<16x1xf32>
      %118 = arith.divf %116, %117 : vector<16x1xf32>
      %119 = vector.broadcast %118 : vector<16x1xf32> to vector<16x32xf32>
      %120 = arith.subf %112, %119 : vector<16x32xf32>
      %121 = arith.mulf %120, %120 : vector<16x32xf32>
      %cst_71 = arith.constant dense<0.000000e+00> : vector<16xf32>
      %122 = vector.multi_reduction <add>, %121, %cst_71 [1] : vector<16x32xf32> to vector<16xf32>
      %123 = vector.shape_cast %122 : vector<16xf32> to vector<16x1xf32>
      %cst_72 = arith.constant 3.200000e+01 : f32
      %124 = vector.broadcast %cst_72 : f32 to vector<16x1xf32>
      %125 = arith.divf %123, %124 : vector<16x1xf32>
      %126 = vector.broadcast %118 : vector<16x1xf32> to vector<16x32xf32>
      %127 = arith.subf %112, %126 : vector<16x32xf32>
      %cst_73 = arith.constant 9.99999974E-6 : f32
      %128 = vector.broadcast %cst_73 : f32 to vector<16x1xf32>
      %129 = arith.addf %125, %128 : vector<16x1xf32>
      %130 = math.rsqrt %129 : vector<16x1xf32>
      %131 = vector.broadcast %130 : vector<16x1xf32> to vector<16x32xf32>
      %132 = arith.mulf %127, %131 : vector<16x32xf32>
      %133 = vector.broadcast %113 : vector<1x32xf32> to vector<16x32xf32>
      %134 = arith.mulf %132, %133 : vector<16x32xf32>
      %135 = vector.broadcast %114 : vector<1x32xf32> to vector<16x32xf32>
      %136 = arith.addf %134, %135 : vector<16x32xf32>
      %c0_74 = arith.constant 0 : index
      %c0_75 = arith.constant 0 : index
      %137 = vector.load %arg18[%c0_74, %c0_75] : memref<16x32xf32, #tpu.memory_space<vmem>>, vector<16x32xf32>
      tpu.vector_store %arg18[%c0_74, %c0_75], %136 {strides = array<i32>} : memref<16x32xf32, #tpu.memory_space<vmem>>, vector<16x32xf32>,
    } else {
    }
    return
  }
  func.func @transform_0(%arg0: i32, %arg1: i32) -> (i32, i32) {
    %c0_i32 = arith.constant 0 : i32
    %c0_i32_0 = arith.constant 0 : i32
    return %arg0, %c0_i32 : i32, i32
  }
  func.func @transform_1(%arg0: i32, %arg1: i32) -> (i32, i32) {
    %c2_i32 = arith.constant 2 : i32
    %0 = arith.muli %arg0, %c2_i32 : i32
    %1 = arith.addi %0, %arg1 : i32
    %c0_i32 = arith.constant 0 : i32
    %c0_i32_0 = arith.constant 0 : i32
    return %1, %c0_i32 : i32, i32
  }
  func.func @transform_2(%arg0: i32, %arg1: i32) -> (i32, i32) {
    %c0_i32 = arith.constant 0 : i32
    %c0_i32_0 = arith.constant 0 : i32
    %c0_i32_1 = arith.constant 0 : i32
    return %c0_i32, %c0_i32_0 : i32, i32
  }
  func.func @transform_3(%arg0: i32, %arg1: i32) -> (i32, i32) {
    %c0_i32 = arith.constant 0 : i32
    %c0_i32_0 = arith.constant 0 : i32
    %c0_i32_1 = arith.constant 0 : i32
    return %c0_i32, %c0_i32_0 : i32, i32
  }
  func.func @transform_4(%arg0: i32, %arg1: i32) -> (i32, i32) {
    %c0_i32 = arith.constant 0 : i32
    %c0_i32_0 = arith.constant 0 : i32
    %c0_i32_1 = arith.constant 0 : i32
    return %c0_i32, %c0_i32_0 : i32, i32
  }
  func.func @transform_5(%arg0: i32, %arg1: i32) -> (i32, i32) {
    %c0_i32 = arith.constant 0 : i32
    %c0_i32_0 = arith.constant 0 : i32
    %c0_i32_1 = arith.constant 0 : i32
    return %c0_i32, %c0_i32_0 : i32, i32
  }
  func.func @transform_6(%arg0: i32, %arg1: i32) -> (i32, i32) {
    %c0_i32 = arith.constant 0 : i32
    %c0_i32_0 = arith.constant 0 : i32
    %c0_i32_1 = arith.constant 0 : i32
    return %c0_i32, %c0_i32_0 : i32, i32
  }
  func.func @transform_7(%arg0: i32, %arg1: i32) -> (i32, i32) {
    %c0_i32 = arith.constant 0 : i32
    %c0_i32_0 = arith.constant 0 : i32
    %c0_i32_1 = arith.constant 0 : i32
    return %c0_i32, %c0_i32_0 : i32, i32
  }
  func.func @transform_8(%arg0: i32, %arg1: i32) -> (i32, i32) {
    %c0_i32 = arith.constant 0 : i32
    %c0_i32_0 = arith.constant 0 : i32
    %c0_i32_1 = arith.constant 0 : i32
    return %c0_i32, %c0_i32_0 : i32, i32
  }
  func.func @transform_9(%arg0: i32, %arg1: i32) -> (i32, i32) {
    %c0_i32 = arith.constant 0 : i32
    %c0_i32_0 = arith.constant 0 : i32
    %c0_i32_1 = arith.constant 0 : i32
    return %c0_i32, %c0_i32_0 : i32, i32
  }
  func.func @transform_10(%arg0: i32, %arg1: i32) -> (i32, i32) {
    %c0_i32 = arith.constant 0 : i32
    %c0_i32_0 = arith.constant 0 : i32
    %c0_i32_1 = arith.constant 0 : i32
    return %c0_i32, %c0_i32_0 : i32, i32
  }
  func.func @transform_11(%arg0: i32, %arg1: i32) -> (i32, i32) {
    %c0_i32 = arith.constant 0 : i32
    %c0_i32_0 = arith.constant 0 : i32
    %c0_i32_1 = arith.constant 0 : i32
    return %c0_i32, %c0_i32_0 : i32, i32
  }
  func.func @transform_12(%arg0: i32, %arg1: i32) -> (i32, i32) {
    %c0_i32 = arith.constant 0 : i32
    %c0_i32_0 = arith.constant 0 : i32
    %c0_i32_1 = arith.constant 0 : i32
    return %c0_i32, %c0_i32_0 : i32, i32
  }
  func.func @transform_13(%arg0: i32, %arg1: i32) -> (i32, i32) {
    %c0_i32 = arith.constant 0 : i32
    %c0_i32_0 = arith.constant 0 : i32
    %c0_i32_1 = arith.constant 0 : i32
    return %c0_i32, %c0_i32_0 : i32, i32
  }
  func.func @transform_14(%arg0: i32, %arg1: i32) -> (i32, i32) {
    %c0_i32 = arith.constant 0 : i32
    %c0_i32_0 = arith.constant 0 : i32
    %c0_i32_1 = arith.constant 0 : i32
    return %c0_i32, %c0_i32_0 : i32, i32
  }
  func.func @transform_15(%arg0: i32, %arg1: i32) -> (i32, i32) {
    %c0_i32 = arith.constant 0 : i32
    %c0_i32_0 = arith.constant 0 : i32
    %c0_i32_1 = arith.constant 0 : i32
    return %c0_i32, %c0_i32_0 : i32, i32
  }
  func.func @transform_16(%arg0: i32, %arg1: i32) -> (i32, i32) {
    %c0_i32 = arith.constant 0 : i32
    %c0_i32_0 = arith.constant 0 : i32
    return %arg0, %c0_i32 : i32, i32
  }
}

</mosaic_0001>

<llo_original>
// kernel: tpu_custom_call.1
$region0: #{tpu_custom_call.1}
  #allocation0 [shape = 'u32[]', space=smem, size = 0x4, offset = 0x4, fixed_abs, tag = 'smem constant byte address 0x4 - core index']
  #allocation1 [shape = 'u32[72,128]{1,0:T(1,128)}', space=vmem, size = 0x9000, scoped, tag = 'internal scratch']
  #allocation2 [shape = 'f32[4,16,8]{2,1,0:T(8,128)}', space=vmem, size = 0x8000, scoped, tag = 'scratch operand']
  #allocation3 [shape = 'f32[4,16,1]{2,1,0:T(8,128)}', space=vmem, size = 0x8000, scoped, tag = 'scratch operand']
  #allocation4 [shape = 'f32[4,16,1]{2,1,0:T(8,128)}', space=vmem, size = 0x8000, scoped, tag = 'scratch operand']
  #allocation5 [shape = 'f32[4,16,8]{2,1,0:T(8,128)}', space=vmem, size = 0x8000, scoped, tag = 'scratch operand']
  %s0 = inlined_call_operand.vmem [shape: f32[32,32], index: 0, kind: input, shape index: {}]
  %s1 = inlined_call_operand.vmem [shape: f32[32,32], index: 1, kind: input, shape index: {}]
  %s2 = inlined_call_operand.vmem [shape: f32[32,32], index: 2, kind: input, shape index: {}]
  %s3 = inlined_call_operand.vmem [shape: f32[1,32], index: 3, kind: input, shape index: {}]
  %s4 = inlined_call_operand.hbm [shape: f32[32,64], index: 4, kind: input, shape index: {}]
  %s5 = inlined_call_operand.vmem [shape: f32[1,64], index: 5, kind: input, shape index: {}]
  %s6 = inlined_call_operand.hbm [shape: f32[32,32], index: 6, kind: input, shape index: {}]
  %s7 = inlined_call_operand.vmem [shape: f32[1,32], index: 7, kind: input, shape index: {}]
  %s8 = inlined_call_operand.vmem [shape: f32[1,32], index: 8, kind: input, shape index: {}]
  %s9 = inlined_call_operand.vmem [shape: f32[1,32], index: 9, kind: input, shape index: {}]
  %s10 = inlined_call_operand.hbm [shape: f32[32,64], index: 10, kind: input, shape index: {}]
  %s11 = inlined_call_operand.vmem [shape: f32[1,64], index: 11, kind: input, shape index: {}]
  %s12 = inlined_call_operand.vmem [shape: f32[64,32], index: 12, kind: input, shape index: {}]
  %s13 = inlined_call_operand.vmem [shape: f32[1,32], index: 13, kind: input, shape index: {}]
  %s14 = inlined_call_operand.vmem [shape: f32[1,32], index: 14, kind: input, shape index: {}]
  %s15 = inlined_call_operand.vmem [shape: f32[1,32], index: 15, kind: input, shape index: {}]
  %s16 = inlined_call_operand.hbm [shape: f32[32,32], index: 16, kind: output, shape index: {}]
  %s17 = sld [smem:[#allocation0]]
  $region117: #{tpu_custom_call.1} parent=0
    _
  %s19 = ssub.s32 1, %s17
  %s20 = scalar_select 0, %s19, %s17
  $region1: #{tpu_custom_call.1} parent=0
    #allocation6 [shape = 'u8[16384]{0}', space=vmem, size = 0x4000, scoped, tag = 'input window, operand 4, single buffered']
    #allocation7 [shape = 's32[2]{0}', space=sflag, size = 0x8, scoped, tag = 'scoped memory for tpu_custom_call.1']
    #allocation8 [shape = 's32[2]{0}', space=sflag, size = 0x8, scoped, tag = 'scoped memory for tpu_custom_call.1']
    #allocation9 [shape = 'u8[16384]{0}', space=vmem, size = 0x4000, scoped, tag = 'input window, operand 6, single buffered']
    #allocation10 [shape = 's32[1]{0}', space=sflag, size = 0x4, scoped, tag = 'scoped memory for tpu_custom_call.1']
    #allocation11 [shape = 'u8[16384]{0}', space=vmem, size = 0x4000, scoped, tag = 'input window, operand 10, single buffered']
    #allocation12 [shape = 'u8[16384]{0}', space=vmem, size = 0x4000, scoped, tag = 'output window, operand 0']
    %21 = vsyncpa [#allocation7], 0
    %22 = vsyncpa [#allocation10], 0
    %23 = vsyncpa [#allocation8], 0
    %s24 = scalar_lea.sflag [#allocation8], 1
    %25 = vsyncpa %s24, 0
    loop: start=0, step=1, limit=6
    $region2: #{tpu_custom_call.1} parent=1 // loop_pre_header
      _
    $region3: #{tpu_custom_call.1} parent=1 // loop_header
      %s27 = sphi 0, %s31
      %p28 = scmp.ge.s32.totalorder %s27, 6
      %s34 = sphi 0, %s46
      %s35 = sphi 0, %s42
      %s36 = sphi 0, %s34
      %s37 = sphi 0, %s35
      %s38 = sphi 0, %s36
      %s39 = sphi 0, %s37
      %s49 = sphi 0, %s51
      %s52 = sphi 0, %s49
      %s53 = sphi 0, %s52
      %s69 = sphi 0, %s53
      %s79 = sphi 0, %s81
      %s82 = sphi 0, %s79
      %s83 = sphi 0, %s82
      %s99 = sphi 0, %s83
      %s103 = sphi 0, %s103
      %s105 = sphi 0, %s103
      %s106 = sphi 0, %s105
      %s120 = sphi 0, %s106
      %s124 = sphi 0, %s124
      %s126 = sphi 0, %s124
      %s127 = sphi 0, %s126
      %s141 = sphi 0, %s127
      %s145 = sphi 0, %s145
      %s147 = sphi 0, %s145
      %s148 = sphi 0, %s147
      %s162 = sphi 0, %s148
      %s166 = sphi 0, %s166
      %s168 = sphi 0, %s166
      %s169 = sphi 0, %s168
      %s183 = sphi 0, %s169
      %s187 = sphi 0, %s187
      %s189 = sphi 0, %s187
      %s190 = sphi 0, %s189
      %s204 = sphi 0, %s190
      %s208 = sphi 0, %s208
      %s210 = sphi 0, %s208
      %s211 = sphi 0, %s210
      %s225 = sphi 0, %s211
      %s229 = sphi 0, %s229
      %s231 = sphi 0, %s229
      %s232 = sphi 0, %s231
      %s246 = sphi 0, %s232
      %s250 = sphi 0, %s250
      %s252 = sphi 0, %s250
      %s253 = sphi 0, %s252
      %s267 = sphi 0, %s253
      %s271 = sphi 0, %s271
      %s273 = sphi 0, %s271
      %s274 = sphi 0, %s273
      %s288 = sphi 0, %s274
      %s292 = sphi 0, %s292
      %s294 = sphi 0, %s292
      %s295 = sphi 0, %s294
      %s309 = sphi 0, %s295
      %s313 = sphi 0, %s313
      %s315 = sphi 0, %s313
      %s316 = sphi 0, %s315
      %s330 = sphi 0, %s316
      %s334 = sphi 0, %s334
      %s336 = sphi 0, %s334
      %s337 = sphi 0, %s336
      %s351 = sphi 0, %s337
      %s355 = sphi 0, %s355
      %s357 = sphi 0, %s355
      %s358 = sphi 0, %s357
      %s372 = sphi 0, %s358
      %s376 = sphi 0, %s376
      %s378 = sphi 0, %s376
      %s379 = sphi 0, %s378
      %s393 = sphi 0, %s379
      %s399 = sphi 0, %s401
      %s402 = sphi 0, %s399
      %s403 = sphi 0, %s402
      %s419 = sphi 0, %s403
    $region4: #{tpu_custom_call.1} parent=1 // loop_header_branch
      %30 = sbr.rel (%p28) target = $region8
    $region5: #{tpu_custom_call.1} parent=1 // loop_body
      %s32 = ssub.s32 %s27, 1
      %s33 = ssub.s32 %s27, 2
      %s40 = sadd.s32 1, %s35
      %p41 = scmp.ge.s32.totalorder %s40, 2
      %s42 = scalar_select %p41, 0, %s40
      %s43 = sadd.s32 1, %s34
      %s44 = scalar_select %p41, %s43, %s34
      %p45 = scmp.ge.s32.totalorder %s44, 2
      %s46 = scalar_select %p45, 0, %s44
      %s47 = ssub.s32 %s34, %s46
      %p48 = scmp.eq.s32.totalorder %s47, 0
      %s50 = sadd.s32 %s49, 1
      %s51 = scalar_select %p48, %s49, %s50
      %p54 = pneg %p48
      %p55 = scmp.eq.s32.totalorder %s27, 3
      %p56 = por %p54, %p55
      %p57 = scmp.ne.s32.totalorder %s49, %s52
      %p58 = scmp.eq.s32.totalorder %s27, 0
      %p59 = por %p57, %p58
      %p60 = scmp.ne.s32.totalorder %s49, %s52
      %p61 = scmp.eq.s32.totalorder %s32, 3
      %p62 = por %p60, %p61
      %p63 = scmp.ne.s32.totalorder %s52, %s53
      %p64 = scmp.eq.s32.totalorder %s32, 0
      %p65 = por %p63, %p64
      %p66 = scmp.ne.s32.totalorder %s52, %s53
      %p67 = scmp.eq.s32.totalorder %s33, 3
      %p68 = por %p66, %p67
      %p70 = scmp.ne.s32.totalorder %s53, %s69
      %p71 = scmp.eq.s32.totalorder %s33, 0
      %p72 = por %p70, %p71
      %s73 = smul.u32 %s34, 2
      %s74 = sadd.s32 %s73, %s35
      %s75 = smul.u32 %s46, 2
      %s76 = sadd.s32 %s75, %s42
      %s77 = ssub.s32 %s74, %s76
      %p78 = scmp.eq.s32.totalorder %s77, 0
      %s80 = sadd.s32 %s79, 1
      %s81 = scalar_select %p78, %s79, %s80
      %p84 = pneg %p78
      %p85 = scmp.eq.s32.totalorder %s27, 3
      %p86 = por %p84, %p85
      %p87 = scmp.ne.s32.totalorder %s79, %s82
      %p88 = scmp.eq.s32.totalorder %s27, 0
      %p89 = por %p87, %p88
      %p90 = scmp.ne.s32.totalorder %s79, %s82
      %p91 = scmp.eq.s32.totalorder %s32, 3
      %p92 = por %p90, %p91
      %p93 = scmp.ne.s32.totalorder %s82, %s83
      %p94 = scmp.eq.s32.totalorder %s32, 0
      %p95 = por %p93, %p94
      %p96 = scmp.ne.s32.totalorder %s82, %s83
      %p97 = scmp.eq.s32.totalorder %s33, 3
      %p98 = por %p96, %p97
      %p100 = scmp.ne.s32.totalorder %s83, %s99
      %p101 = scmp.eq.s32.totalorder %s33, 0
      %p102 = por %p100, %p101
      %s104 = sadd.s32 %s103, 1
      %p107 = scmp.eq.s32.totalorder %s27, 3
      %p108 = scmp.ne.s32.totalorder %s103, %s105
      %p109 = scmp.eq.s32.totalorder %s27, 0
      %p110 = por %p108, %p109
      %p111 = scmp.ne.s32.totalorder %s103, %s105
      %p112 = scmp.eq.s32.totalorder %s32, 3
      %p113 = por %p111, %p112
      %p114 = scmp.ne.s32.totalorder %s105, %s106
      %p115 = scmp.eq.s32.totalorder %s32, 0
      %p116 = por %p114, %p115
      %p117 = scmp.ne.s32.totalorder %s105, %s106
      %p118 = scmp.eq.s32.totalorder %s33, 3
      %p119 = por %p117, %p118
      %p121 = scmp.ne.s32.totalorder %s106, %s120
      %p122 = scmp.eq.s32.totalorder %s33, 0
      %p123 = por %p121, %p122
      %s125 = sadd.s32 %s124, 1
      %p128 = scmp.eq.s32.totalorder %s27, 3
      %p129 = scmp.ne.s32.totalorder %s124, %s126
      %p130 = scmp.eq.s32.totalorder %s27, 0
      %p131 = por %p129, %p130
      %p132 = scmp.ne.s32.totalorder %s124, %s126
      %p133 = scmp.eq.s32.totalorder %s32, 3
      %p134 = por %p132, %p133
      %p135 = scmp.ne.s32.totalorder %s126, %s127
      %p136 = scmp.eq.s32.totalorder %s32, 0
      %p137 = por %p135, %p136
      %p138 = scmp.ne.s32.totalorder %s126, %s127
      %p139 = scmp.eq.s32.totalorder %s33, 3
      %p140 = por %p138, %p139
      %p142 = scmp.ne.s32.totalorder %s127, %s141
      %p143 = scmp.eq.s32.totalorder %s33, 0
      %p144 = por %p142, %p143
      %s146 = sadd.s32 %s145, 1
      %p149 = scmp.eq.s32.totalorder %s27, 3
      %p150 = scmp.ne.s32.totalorder %s145, %s147
      %p151 = scmp.eq.s32.totalorder %s27, 0
      %p152 = por %p150, %p151
      %p153 = scmp.ne.s32.totalorder %s145, %s147
      %p154 = scmp.eq.s32.totalorder %s32, 3
      %p155 = por %p153, %p154
      %p156 = scmp.ne.s32.totalorder %s147, %s148
      %p157 = scmp.eq.s32.totalorder %s32, 0
      %p158 = por %p156, %p157
      %p159 = scmp.ne.s32.totalorder %s147, %s148
      %p160 = scmp.eq.s32.totalorder %s33, 3
      %p161 = por %p159, %p160
      %p163 = scmp.ne.s32.totalorder %s148, %s162
      %p164 = scmp.eq.s32.totalorder %s33, 0
      %p165 = por %p163, %p164
      %s167 = sadd.s32 %s166, 1
      %p170 = scmp.eq.s32.totalorder %s27, 3
      %p171 = scmp.ne.s32.totalorder %s166, %s168
      %p172 = scmp.eq.s32.totalorder %s27, 0
      %p173 = por %p171, %p172
      %p174 = scmp.ne.s32.totalorder %s166, %s168
      %p175 = scmp.eq.s32.totalorder %s32, 3
      %p176 = por %p174, %p175
      %p177 = scmp.ne.s32.totalorder %s168, %s169
      %p178 = scmp.eq.s32.totalorder %s32, 0
      %p179 = por %p177, %p178
      %p180 = scmp.ne.s32.totalorder %s168, %s169
      %p181 = scmp.eq.s32.totalorder %s33, 3
      %p182 = por %p180, %p181
      %p184 = scmp.ne.s32.totalorder %s169, %s183
      %p185 = scmp.eq.s32.totalorder %s33, 0
      %p186 = por %p184, %p185
      %s188 = sadd.s32 %s187, 1
      %p191 = scmp.eq.s32.totalorder %s27, 3
      %p192 = scmp.ne.s32.totalorder %s187, %s189
      %p193 = scmp.eq.s32.totalorder %s27, 0
      %p194 = por %p192, %p193
      %p195 = scmp.ne.s32.totalorder %s187, %s189
      %p196 = scmp.eq.s32.totalorder %s32, 3
      %p197 = por %p195, %p196
      %p198 = scmp.ne.s32.totalorder %s189, %s190
      %p199 = scmp.eq.s32.totalorder %s32, 0
      %p200 = por %p198, %p199
      %p201 = scmp.ne.s32.totalorder %s189, %s190
      %p202 = scmp.eq.s32.totalorder %s33, 3
      %p203 = por %p201, %p202
      %p205 = scmp.ne.s32.totalorder %s190, %s204
      %p206 = scmp.eq.s32.totalorder %s33, 0
      %p207 = por %p205, %p206
      %s209 = sadd.s32 %s208, 1
      %p212 = scmp.eq.s32.totalorder %s27, 3
      %p213 = scmp.ne.s32.totalorder %s208, %s210
      %p214 = scmp.eq.s32.totalorder %s27, 0
      %p215 = por %p213, %p214
      %p216 = scmp.ne.s32.totalorder %s208, %s210
      %p217 = scmp.eq.s32.totalorder %s32, 3
      %p218 = por %p216, %p217
      %p219 = scmp.ne.s32.totalorder %s210, %s211
      %p220 = scmp.eq.s32.totalorder %s32, 0
      %p221 = por %p219, %p220
      %p222 = scmp.ne.s32.totalorder %s210, %s211
      %p223 = scmp.eq.s32.totalorder %s33, 3
      %p224 = por %p222, %p223
      %p226 = scmp.ne.s32.totalorder %s211, %s225
      %p227 = scmp.eq.s32.totalorder %s33, 0
      %p228 = por %p226, %p227
      %s230 = sadd.s32 %s229, 1
      %p233 = scmp.eq.s32.totalorder %s27, 3
      %p234 = scmp.ne.s32.totalorder %s229, %s231
      %p235 = scmp.eq.s32.totalorder %s27, 0
      %p236 = por %p234, %p235
      %p237 = scmp.ne.s32.totalorder %s229, %s231
      %p238 = scmp.eq.s32.totalorder %s32, 3
      %p239 = por %p237, %p238
      %p240 = scmp.ne.s32.totalorder %s231, %s232
      %p241 = scmp.eq.s32.totalorder %s32, 0
      %p242 = por %p240, %p241
      %p243 = scmp.ne.s32.totalorder %s231, %s232
      %p244 = scmp.eq.s32.totalorder %s33, 3
      %p245 = por %p243, %p244
      %p247 = scmp.ne.s32.totalorder %s232, %s246
      %p248 = scmp.eq.s32.totalorder %s33, 0
      %p249 = por %p247, %p248
      %s251 = sadd.s32 %s250, 1
      %p254 = scmp.eq.s32.totalorder %s27, 3
      %p255 = scmp.ne.s32.totalorder %s250, %s252
      %p256 = scmp.eq.s32.totalorder %s27, 0
      %p257 = por %p255, %p256
      %p258 = scmp.ne.s32.totalorder %s250, %s252
      %p259 = scmp.eq.s32.totalorder %s32, 3
      %p260 = por %p258, %p259
      %p261 = scmp.ne.s32.totalorder %s252, %s253
      %p262 = scmp.eq.s32.totalorder %s32, 0
      %p263 = por %p261, %p262
      %p264 = scmp.ne.s32.totalorder %s252, %s253
      %p265 = scmp.eq.s32.totalorder %s33, 3
      %p266 = por %p264, %p265
      %p268 = scmp.ne.s32.totalorder %s253, %s267
      %p269 = scmp.eq.s32.totalorder %s33, 0
      %p270 = por %p268, %p269
      %s272 = sadd.s32 %s271, 1
      %p275 = scmp.eq.s32.totalorder %s27, 3
      %p276 = scmp.ne.s32.totalorder %s271, %s273
      %p277 = scmp.eq.s32.totalorder %s27, 0
      %p278 = por %p276, %p277
      %p279 = scmp.ne.s32.totalorder %s271, %s273
      %p280 = scmp.eq.s32.totalorder %s32, 3
      %p281 = por %p279, %p280
      %p282 = scmp.ne.s32.totalorder %s273, %s274
      %p283 = scmp.eq.s32.totalorder %s32, 0
      %p284 = por %p282, %p283
      %p285 = scmp.ne.s32.totalorder %s273, %s274
      %p286 = scmp.eq.s32.totalorder %s33, 3
      %p287 = por %p285, %p286
      %p289 = scmp.ne.s32.totalorder %s274, %s288
      %p290 = scmp.eq.s32.totalorder %s33, 0
      %p291 = por %p289, %p290
      %s293 = sadd.s32 %s292, 1
      %p296 = scmp.eq.s32.totalorder %s27, 3
      %p297 = scmp.ne.s32.totalorder %s292, %s294
      %p298 = scmp.eq.s32.totalorder %s27, 0
      %p299 = por %p297, %p298
      %p300 = scmp.ne.s32.totalorder %s292, %s294
      %p301 = scmp.eq.s32.totalorder %s32, 3
      %p302 = por %p300, %p301
      %p303 = scmp.ne.s32.totalorder %s294, %s295
      %p304 = scmp.eq.s32.totalorder %s32, 0
      %p305 = por %p303, %p304
      %p306 = scmp.ne.s32.totalorder %s294, %s295
      %p307 = scmp.eq.s32.totalorder %s33, 3
      %p308 = por %p306, %p307
      %p310 = scmp.ne.s32.totalorder %s295, %s309
      %p311 = scmp.eq.s32.totalorder %s33, 0
      %p312 = por %p310, %p311
      %s314 = sadd.s32 %s313, 1
      %p317 = scmp.eq.s32.totalorder %s27, 3
      %p318 = scmp.ne.s32.totalorder %s313, %s315
      %p319 = scmp.eq.s32.totalorder %s27, 0
      %p320 = por %p318, %p319
      %p321 = scmp.ne.s32.totalorder %s313, %s315
      %p322 = scmp.eq.s32.totalorder %s32, 3
      %p323 = por %p321, %p322
      %p324 = scmp.ne.s32.totalorder %s315, %s316
      %p325 = scmp.eq.s32.totalorder %s32, 0
      %p326 = por %p324, %p325
      %p327 = scmp.ne.s32.totalorder %s315, %s316
      %p328 = scmp.eq.s32.totalorder %s33, 3
      %p329 = por %p327, %p328
      %p331 = scmp.ne.s32.totalorder %s316, %s330
      %p332 = scmp.eq.s32.totalorder %s33, 0
      %p333 = por %p331, %p332
      %s335 = sadd.s32 %s334, 1
      %p338 = scmp.eq.s32.totalorder %s27, 3
      %p339 = scmp.ne.s32.totalorder %s334, %s336
      %p340 = scmp.eq.s32.totalorder %s27, 0
      %p341 = por %p339, %p340
      %p342 = scmp.ne.s32.totalorder %s334, %s336
      %p343 = scmp.eq.s32.totalorder %s32, 3
      %p344 = por %p342, %p343
      %p345 = scmp.ne.s32.totalorder %s336, %s337
      %p346 = scmp.eq.s32.totalorder %s32, 0
      %p347 = por %p345, %p346
      %p348 = scmp.ne.s32.totalorder %s336, %s337
      %p349 = scmp.eq.s32.totalorder %s33, 3
      %p350 = por %p348, %p349
      %p352 = scmp.ne.s32.totalorder %s337, %s351
      %p353 = scmp.eq.s32.totalorder %s33, 0
      %p354 = por %p352, %p353
      %s356 = sadd.s32 %s355, 1
      %p359 = scmp.eq.s32.totalorder %s27, 3
      %p360 = scmp.ne.s32.totalorder %s355, %s357
      %p361 = scmp.eq.s32.totalorder %s27, 0
      %p362 = por %p360, %p361
      %p363 = scmp.ne.s32.totalorder %s355, %s357
      %p364 = scmp.eq.s32.totalorder %s32, 3
      %p365 = por %p363, %p364
      %p366 = scmp.ne.s32.totalorder %s357, %s358
      %p367 = scmp.eq.s32.totalorder %s32, 0
      %p368 = por %p366, %p367
      %p369 = scmp.ne.s32.totalorder %s357, %s358
      %p370 = scmp.eq.s32.totalorder %s33, 3
      %p371 = por %p369, %p370
      %p373 = scmp.ne.s32.totalorder %s358, %s372
      %p374 = scmp.eq.s32.totalorder %s33, 0
      %p375 = por %p373, %p374
      %s377 = sadd.s32 %s376, 1
      %p380 = scmp.eq.s32.totalorder %s27, 3
      %p381 = scmp.ne.s32.totalorder %s376, %s378
      %p382 = scmp.eq.s32.totalorder %s27, 0
      %p383 = por %p381, %p382
      %p384 = scmp.ne.s32.totalorder %s376, %s378
      %p385 = scmp.eq.s32.totalorder %s32, 3
      %p386 = por %p384, %p385
      %p387 = scmp.ne.s32.totalorder %s378, %s379
      %p388 = scmp.eq.s32.totalorder %s32, 0
      %p389 = por %p387, %p388
      %p390 = scmp.ne.s32.totalorder %s378, %s379
      %p391 = scmp.eq.s32.totalorder %s33, 3
      %p392 = por %p390, %p391
      %p394 = scmp.ne.s32.totalorder %s379, %s393
      %p395 = scmp.eq.s32.totalorder %s33, 0
      %p396 = por %p394, %p395
      %s397 = ssub.s32 %s34, %s46
      %p398 = scmp.eq.s32.totalorder %s397, 0
      %s400 = sadd.s32 %s399, 1
      %s401 = scalar_select %p398, %s399, %s400
      %p404 = pneg %p398
      %p405 = scmp.eq.s32.totalorder %s27, 3
      %p406 = por %p404, %p405
      %p407 = scmp.ne.s32.totalorder %s399, %s402
      %p408 = scmp.eq.s32.totalorder %s27, 0
      %p409 = por %p407, %p408
      %p410 = scmp.ne.s32.totalorder %s399, %s402
      %p411 = scmp.eq.s32.totalorder %s32, 3
      %p412 = por %p410, %p411
      %p413 = scmp.ne.s32.totalorder %s402, %s403
      %p414 = scmp.eq.s32.totalorder %s32, 0
      %p415 = por %p413, %p414
      %p416 = scmp.ne.s32.totalorder %s402, %s403
      %p417 = scmp.eq.s32.totalorder %s33, 3
      %p418 = por %p416, %p417
      %p420 = scmp.ne.s32.totalorder %s403, %s419
      %p421 = scmp.eq.s32.totalorder %s33, 0
      %p422 = por %p420, %p421
      %p423 = scmp.le.s32.totalorder 1, %s27
      %p424 = scmp.lt.s32.totalorder %s27, 5
      %p425 = pnand %p423, %p424
      %p426 = pneg %p425
      // Predicated region
      $region9: #{tpu_custom_call.1} parent=5 // pred_check
        _
      $region10: #{tpu_custom_call.1} parent=5 // pred_check_branch
        %428 = sbr.rel (%p425) target = $region12
      $region11: #{tpu_custom_call.1} parent=5 // pred_region
        %s429 = ssub.s32 %s27, 1
        // Predicated region
        $region13: #{tpu_custom_call.1} parent=11 // pred_check
          %p430 = pneg %p116
        $region14: #{tpu_custom_call.1} parent=11 // pred_check_branch
          %432 = sbr.rel (%p430) target = $region16
        $region15: #{tpu_custom_call.1} parent=11 // pred_region
          _
        $region16: #{tpu_custom_call.1} parent=11 // pred_fallthru
          _
        // Predicated region
        $region17: #{tpu_custom_call.1} parent=11 // pred_check
          %p433 = pneg %p137
        $region18: #{tpu_custom_call.1} parent=11 // pred_check_branch
          %435 = sbr.rel (%p433) target = $region20
        $region19: #{tpu_custom_call.1} parent=11 // pred_region
          _
        $region20: #{tpu_custom_call.1} parent=11 // pred_fallthru
          _
        // Predicated region
        $region21: #{tpu_custom_call.1} parent=11 // pred_check
          %p436 = pneg %p158
        $region22: #{tpu_custom_call.1} parent=11 // pred_check_branch
          %438 = sbr.rel (%p436) target = $region24
        $region23: #{tpu_custom_call.1} parent=11 // pred_region
          %440 = vsyncadd [#allocation7], 0
          %s441 = sshll.u32 %s4, 4
          %s442 = int_to_ptr.hbm [resolvable:$true] %s441
          %s443 = sshll.u32 [#allocation6], 4
          %s444 = int_to_ptr.vmem [resolvable:$true] %s443
          %449 = dma.hbm_to_vmem [thread:$0]  %s442, 512, %s444, [#allocation7], 128, 128, 8
        $region24: #{tpu_custom_call.1} parent=11 // pred_fallthru
          _
        // Predicated region
        $region25: #{tpu_custom_call.1} parent=11 // pred_check
          %p450 = pneg %p179
        $region26: #{tpu_custom_call.1} parent=11 // pred_check_branch
          %452 = sbr.rel (%p450) target = $region28
        $region27: #{tpu_custom_call.1} parent=11 // pred_region
          _
        $region28: #{tpu_custom_call.1} parent=11 // pred_fallthru
          _
        // Predicated region
        $region29: #{tpu_custom_call.1} parent=11 // pred_check
          %p453 = pneg %p200
        $region30: #{tpu_custom_call.1} parent=11 // pred_check_branch
          %455 = sbr.rel (%p453) target = $region32
        $region31: #{tpu_custom_call.1} parent=11 // pred_region
          %457 = vsyncadd [#allocation10], 0
          %s458 = sshll.u32 %s6, 4
          %s459 = int_to_ptr.hbm [resolvable:$true] %s458
          %s460 = sshll.u32 [#allocation9], 4
          %s461 = int_to_ptr.vmem [resolvable:$true] %s460
          %466 = dma.hbm_to_vmem [thread:$0]  %s459, 512, %s461, [#allocation10], 128, 128, 8
        $region32: #{tpu_custom_call.1} parent=11 // pred_fallthru
          _
        // Predicated region
        $region33: #{tpu_custom_call.1} parent=11 // pred_check
          %p467 = pneg %p221
        $region34: #{tpu_custom_call.1} parent=11 // pred_check_branch
          %469 = sbr.rel (%p467) target = $region36
        $region35: #{tpu_custom_call.1} parent=11 // pred_region
          _
        $region36: #{tpu_custom_call.1} parent=11 // pred_fallthru
          _
        // Predicated region
        $region37: #{tpu_custom_call.1} parent=11 // pred_check
          %p470 = pneg %p242
        $region38: #{tpu_custom_call.1} parent=11 // pred_check_branch
          %472 = sbr.rel (%p470) target = $region40
        $region39: #{tpu_custom_call.1} parent=11 // pred_region
          _
        $region40: #{tpu_custom_call.1} parent=11 // pred_fallthru
          _
        // Predicated region
        $region41: #{tpu_custom_call.1} parent=11 // pred_check
          %p473 = pneg %p263
        $region42: #{tpu_custom_call.1} parent=11 // pred_check_branch
          %475 = sbr.rel (%p473) target = $region44
        $region43: #{tpu_custom_call.1} parent=11 // pred_region
          _
        $region44: #{tpu_custom_call.1} parent=11 // pred_fallthru
          _
        // Predicated region
        $region45: #{tpu_custom_call.1} parent=11 // pred_check
          %p476 = pneg %p284
        $region46: #{tpu_custom_call.1} parent=11 // pred_check_branch
          %478 = sbr.rel (%p476) target = $region48
        $region47: #{tpu_custom_call.1} parent=11 // pred_region
          %480 = vsyncadd [#allocation10], 0
          %s481 = sshll.u32 %s10, 4
          %s482 = int_to_ptr.hbm [resolvable:$true] %s481
          %s483 = sshll.u32 [#allocation11], 4
          %s484 = int_to_ptr.vmem [resolvable:$true] %s483
          %489 = dma.hbm_to_vmem [thread:$0]  %s482, 512, %s484, [#allocation10], 128, 128, 8
        $region48: #{tpu_custom_call.1} parent=11 // pred_fallthru
          _
        // Predicated region
        $region49: #{tpu_custom_call.1} parent=11 // pred_check
          %p490 = pneg %p305
        $region50: #{tpu_custom_call.1} parent=11 // pred_check_branch
          %492 = sbr.rel (%p490) target = $region52
        $region51: #{tpu_custom_call.1} parent=11 // pred_region
          _
        $region52: #{tpu_custom_call.1} parent=11 // pred_fallthru
          _
        // Predicated region
        $region53: #{tpu_custom_call.1} parent=11 // pred_check
          %p493 = pneg %p326
        $region54: #{tpu_custom_call.1} parent=11 // pred_check_branch
          %495 = sbr.rel (%p493) target = $region56
        $region55: #{tpu_custom_call.1} parent=11 // pred_region
          _
        $region56: #{tpu_custom_call.1} parent=11 // pred_fallthru
          _
        // Predicated region
        $region57: #{tpu_custom_call.1} parent=11 // pred_check
          %p496 = pneg %p347
        $region58: #{tpu_custom_call.1} parent=11 // pred_check_branch
          %498 = sbr.rel (%p496) target = $region60
        $region59: #{tpu_custom_call.1} parent=11 // pred_region
          _
        $region60: #{tpu_custom_call.1} parent=11 // pred_fallthru
          _
        // Predicated region
        $region61: #{tpu_custom_call.1} parent=11 // pred_check
          %p499 = pneg %p368
        $region62: #{tpu_custom_call.1} parent=11 // pred_check_branch
          %501 = sbr.rel (%p499) target = $region64
        $region63: #{tpu_custom_call.1} parent=11 // pred_region
          _
        $region64: #{tpu_custom_call.1} parent=11 // pred_fallthru
          _
        // Predicated region
        $region65: #{tpu_custom_call.1} parent=11 // pred_check
          %p502 = pneg %p389
        $region66: #{tpu_custom_call.1} parent=11 // pred_check_branch
          %504 = sbr.rel (%p502) target = $region68
        $region67: #{tpu_custom_call.1} parent=11 // pred_region
          _
        $region68: #{tpu_custom_call.1} parent=11 // pred_fallthru
          _
      $region12: #{tpu_custom_call.1} parent=5 // pred_fallthru
        _
      %p505 = scmp.lt.s32.totalorder %s27, 4
      // Predicated region
      $region69: #{tpu_custom_call.1} parent=5 // pred_check
        %p506 = pneg %p505
      $region70: #{tpu_custom_call.1} parent=5 // pred_check_branch
        %508 = sbr.rel (%p506) target = $region72
      $region71: #{tpu_custom_call.1} parent=5 // pred_region
        // Predicated region
        $region73: #{tpu_custom_call.1} parent=71 // pred_check
          %p509 = pneg %p59
        $region74: #{tpu_custom_call.1} parent=71 // pred_check_branch
          %511 = sbr.rel (%p509) target = $region76
        $region75: #{tpu_custom_call.1} parent=71 // pred_region
          %s512 = smul.u32 2, %s34
          %p513 = scmp.lt.s32.totalorder %s512, 3
          %s514 = scalar_select %p513, %s512, 3
          %s515 = smul.addr %s514, 8
          %s516 = scalar_lea.vmem %s0, %s515
          %s517 = smul.u32 2, %s34
        $region76: #{tpu_custom_call.1} parent=71 // pred_fallthru
          _
        // Predicated region
        $region77: #{tpu_custom_call.1} parent=71 // pred_check
          %p518 = pneg %p89
        $region78: #{tpu_custom_call.1} parent=71 // pred_check_branch
          %520 = sbr.rel (%p518) target = $region80
        $region79: #{tpu_custom_call.1} parent=71 // pred_region
          %s521 = smul.u32 %s34, 2
          %s522 = sadd.s32 %s521, %s35
          %p523 = scmp.lt.s32.totalorder %s522, 3
          %s524 = scalar_select %p523, %s522, 3
          %s525 = smul.addr %s524, 8
          %s526 = scalar_lea.vmem %s1, %s525
          %s527 = smul.u32 %s34, 2
          %s528 = sadd.s32 %s527, %s35
        $region80: #{tpu_custom_call.1} parent=71 // pred_fallthru
          _
      $region72: #{tpu_custom_call.1} parent=5 // pred_fallthru
        _
      %p529 = scmp.le.s32.totalorder 1, %s27
      %p530 = scmp.lt.s32.totalorder %s27, 5
      %p531 = pnand %p529, %p530
      %p532 = pneg %p531
      // Predicated region
      $region81: #{tpu_custom_call.1} parent=5 // pred_check
        _
      $region82: #{tpu_custom_call.1} parent=5 // pred_check_branch
        %534 = sbr.rel (%p531) target = $region84
      $region83: #{tpu_custom_call.1} parent=5 // pred_region
        %s535 = ssub.s32 %s27, 1
        // Predicated region
        $region85: #{tpu_custom_call.1} parent=83 // pred_check
          %p536 = pneg %p158
        $region86: #{tpu_custom_call.1} parent=83 // pred_check_branch
          %538 = sbr.rel (%p536) target = $region88
        $region87: #{tpu_custom_call.1} parent=83 // pred_region
          %540 = dma.done [#allocation7], 512
        $region88: #{tpu_custom_call.1} parent=83 // pred_fallthru
          _
        // Predicated region
        $region89: #{tpu_custom_call.1} parent=83 // pred_check
          %p541 = pneg %p200
        $region90: #{tpu_custom_call.1} parent=83 // pred_check_branch
          %543 = sbr.rel (%p541) target = $region92
        $region91: #{tpu_custom_call.1} parent=83 // pred_region
          %545 = dma.done [#allocation10], 512
        $region92: #{tpu_custom_call.1} parent=83 // pred_fallthru
          _
        // Predicated region
        $region93: #{tpu_custom_call.1} parent=83 // pred_check
          %p546 = pneg %p284
        $region94: #{tpu_custom_call.1} parent=83 // pred_check_branch
          %548 = sbr.rel (%p546) target = $region96
        $region95: #{tpu_custom_call.1} parent=83 // pred_region
          %550 = dma.done [#allocation10], 512
        $region96: #{tpu_custom_call.1} parent=83 // pred_fallthru
          _
        %s551 = smul.u32 2, %s36
        %p552 = scmp.lt.s32.totalorder %s551, 3
        %s553 = scalar_select %p552, %s551, 3
        %s554 = smul.addr %s553, 8
        %s555 = scalar_lea.vmem %s0, %s554
        %p556 = pneg %p65
        %p557 = pneg %p62
        %s558 = smul.u32 %s36, 2
        %s559 = sadd.s32 %s558, %s37
        %p560 = scmp.lt.s32.totalorder %s559, 3
        %s561 = scalar_select %p560, %s559, 3
        %s562 = smul.addr %s561, 8
        %s563 = scalar_lea.vmem %s1, %s562
        %p564 = pneg %p95
        %p565 = pneg %p92
        %p566 = pneg %p116
        %p567 = pneg %p113
        %p568 = pneg %p137
        %p569 = pneg %p134
        %p570 = pneg %p158
        %p571 = pneg %p155
        %p572 = pneg %p179
        %p573 = pneg %p176
        %p574 = pneg %p200
        %p575 = pneg %p197
        %p576 = pneg %p221
        %p577 = pneg %p218
        %p578 = pneg %p242
        %p579 = pneg %p239
        %p580 = pneg %p263
        %p581 = pneg %p260
        %p582 = pneg %p284
        %p583 = pneg %p281
        %p584 = pneg %p305
        %p585 = pneg %p302
        %p586 = pneg %p326
        %p587 = pneg %p323
        %p588 = pneg %p347
        %p589 = pneg %p344
        %p590 = pneg %p368
        %p591 = pneg %p365
        %p592 = pneg %p389
        %p593 = pneg %p386
        %p594 = pneg %p415
        %p595 = pneg %p412
        %s596 = sand.u32 %s402, 1
        %s597 = scalar_lea.sflag [#allocation8], %s596
        %s598 = sand.u32 %s402, 1
        %s599 = smul.addr %s598, 16
        %s600 = scalar_lea.vmem [#allocation12], %s599
        %s601 = smul.u32 2, %s36
        %p602 = scmp.lt.s32.totalorder %s601, 3
        %s603 = scalar_select %p602, %s601, 3
        %s604 = smul.addr %s603, 8
        %s605 = scalar_lea.vmem %s0, %s604
        %s606 = smul.u32 2, %s36
        %s607 = smul.u32 %s36, 2
        %s608 = sadd.s32 %s607, %s37
        %p609 = scmp.lt.s32.totalorder %s608, 3
        %s610 = scalar_select %p609, %s608, 3
        %s611 = smul.addr %s610, 8
        %s612 = scalar_lea.vmem %s1, %s611
        %s613 = smul.u32 %s36, 2
        %s614 = sadd.s32 %s613, %s37
        %s615 = smul.u32 2, %s36
        %p616 = scmp.eq.s32.totalorder %s37, 0
        // Predicated region
        $region97: #{tpu_custom_call.1} parent=83 // pred_check
          %p617 = pneg %p616
        $region98: #{tpu_custom_call.1} parent=83 // pred_check_branch
          %619 = sbr.rel (%p617) target = $region100
        $region99: #{tpu_custom_call.1} parent=83 // pred_region
          %v620 = vld [vmem:[%s605] sm:$0xff]
          %v621 = vld [vmem:[%s605 + $0x8] sm:$0xff]
          %v622 = vld [vmem:[%s2] sm:$0xff]
          %v623 = vld [vmem:[%s2 + $0x8] sm:$0xff]
          %v624 = vld [vmem:[%s2 + $0x10] sm:$0xff]
          %v625 = vld [vmem:[%s2 + $0x18] sm:$0xff]
          %v626 = vld [vmem:[%s3] sm:$0x1]
          %v628 = vperm.slane %v626, 0
          %vm630 = vcmask 261120
          %v632 = vsel %vm630, %v620, 0
          %v635 = vsel %vm630, %v621, 0
          %637 = vmatpush.msra.mxu0 0.0
          %638 = vmatpush.msra.mxu0 0.0
          %639 = vmatpush.msra.mxu0 0.0
          %640 = vmatpush.msra.mxu0 0.0
          %641 = vmatpush.msra.mxu0 0.0
          %642 = vmatpush.msra.mxu0 0.0
          %643 = vmatpush.msra.mxu0 0.0
          %644 = vmatpush.msra.mxu0 0.0
          %645 = vmatpush.msra.mxu0 0.0
          %646 = vmatpush.msra.mxu0 0.0
          %647 = vmatpush.msra.mxu0 0.0
          %648 = vmatpush.msra.mxu0 0.0
          %649 = vmatpush.msra.mxu0 %v625
          %650 = vmatpush.msra.mxu0 %v624
          %651 = vmatpush.msra.mxu0 %v623
          %652 = vmatpush.msra.mxu0 %v622
          %653 = vmatmul.f32.gmra.mxu0 %v632
          %v654 = vpop.f32.mrf.mxu0
          %v655 = vadd.f32 %v628, %v654
          %656 = vmatmul.f32.gmra.mxu0 %v635
          %v657 = vpop.f32.mrf.mxu0
          %v658 = vadd.f32 %v628, %v657
          %659 = vdwg.mxu0
          %662 = vrot.lane.b32.xlu0 %v655, 120
          %v663 = vpop.permute.xlu0 %662
          %664 = vrot.lane.b32.xlu0 %v658, 120
          %v665 = vpop.permute.xlu0 %664
          %668 = vrot.lane.b32.xlu0 %v655, 112
          %v669 = vpop.permute.xlu0 %668
          %670 = vrot.lane.b32.xlu0 %v658, 112
          %v671 = vpop.permute.xlu0 %670
          %674 = vrot.lane.b32.xlu0 %v655, 104
          %v675 = vpop.permute.xlu0 %674
          %676 = vrot.lane.b32.xlu0 %v658, 104
          %v677 = vpop.permute.xlu0 %676
          %vm680 = vcmask 64512
          %681 = vst.msk [vmem:[#allocation2] sm:$0xff] %vm680, %v655
          %682 = vst.msk [vmem:[#allocation2 + $0x8] sm:$0xff] %vm680, %v658
          %683 = vst.msk [vmem:[#allocation2 + $0x10] sm:$0xff] %vm680, %v663
          %684 = vst.msk [vmem:[#allocation2 + $0x18] sm:$0xff] %vm680, %v665
          %685 = vst.msk [vmem:[#allocation2 + $0x20] sm:$0xff] %vm680, %v669
          %686 = vst.msk [vmem:[#allocation2 + $0x28] sm:$0xff] %vm680, %v671
          %687 = vst.msk [vmem:[#allocation2 + $0x30] sm:$0xff] %vm680, %v675
          %688 = vst.msk [vmem:[#allocation2 + $0x38] sm:$0xff] %vm680, %v677
          %vm689 = vcmask 7168
          %690 = vst.msk [vmem:[#allocation3] sm:$0xff] %vm689, -inf
          %691 = vst.msk [vmem:[#allocation3 + $0x8] sm:$0xff] %vm689, -inf
          %692 = vst.msk [vmem:[#allocation3 + $0x10] sm:$0xff] %vm689, -inf
          %693 = vst.msk [vmem:[#allocation3 + $0x18] sm:$0xff] %vm689, -inf
          %694 = vst.msk [vmem:[#allocation3 + $0x20] sm:$0xff] %vm689, -inf
          %695 = vst.msk [vmem:[#allocation3 + $0x28] sm:$0xff] %vm689, -inf
          %696 = vst.msk [vmem:[#allocation3 + $0x30] sm:$0xff] %vm689, -inf
          %697 = vst.msk [vmem:[#allocation3 + $0x38] sm:$0xff] %vm689, -inf
          %698 = vst.msk [vmem:[#allocation4] sm:$0xff] %vm689, 0.0
          %699 = vst.msk [vmem:[#allocation4 + $0x8] sm:$0xff] %vm689, 0.0
          %700 = vst.msk [vmem:[#allocation4 + $0x10] sm:$0xff] %vm689, 0.0
          %701 = vst.msk [vmem:[#allocation4 + $0x18] sm:$0xff] %vm689, 0.0
          %702 = vst.msk [vmem:[#allocation4 + $0x20] sm:$0xff] %vm689, 0.0
          %703 = vst.msk [vmem:[#allocation4 + $0x28] sm:$0xff] %vm689, 0.0
          %704 = vst.msk [vmem:[#allocation4 + $0x30] sm:$0xff] %vm689, 0.0
          %705 = vst.msk [vmem:[#allocation4 + $0x38] sm:$0xff] %vm689, 0.0
          %706 = vst.msk [vmem:[#allocation5] sm:$0xff] %vm680, 0.0
          %707 = vst.msk [vmem:[#allocation5 + $0x8] sm:$0xff] %vm680, 0.0
          %708 = vst.msk [vmem:[#allocation5 + $0x10] sm:$0xff] %vm680, 0.0
          %709 = vst.msk [vmem:[#allocation5 + $0x18] sm:$0xff] %vm680, 0.0
          %710 = vst.msk [vmem:[#allocation5 + $0x20] sm:$0xff] %vm680, 0.0
          %711 = vst.msk [vmem:[#allocation5 + $0x28] sm:$0xff] %vm680, 0.0
          %712 = vst.msk [vmem:[#allocation5 + $0x30] sm:$0xff] %vm680, 0.0
          %713 = vst.msk [vmem:[#allocation5 + $0x38] sm:$0xff] %vm680, 0.0
        $region100: #{tpu_custom_call.1} parent=83 // pred_fallthru
          _
        %v714 = vld [vmem:[%s612] sm:$0xff]
        %v715 = vld [vmem:[#allocation6] sm:$0xff]
        %v716 = vld [vmem:[#allocation6 + $0x8] sm:$0xff]
        %v717 = vld [vmem:[#allocation6 + $0x10] sm:$0xff]
        %v718 = vld [vmem:[#allocation6 + $0x18] sm:$0xff]
        %v719 = vld [vmem:[%s5] sm:$0x1]
        %v721 = vperm.slane %v719, 0
        %vm723 = vcmask 261120
        %v725 = vsel %vm723, %v714, 0
        %727 = vmatpush.msra.mxu0 0.0
        %728 = vmatpush.msra.mxu0 0.0
        %729 = vmatpush.msra.mxu0 0.0
        %730 = vmatpush.msra.mxu0 0.0
        %731 = vmatpush.msra.mxu0 0.0
        %732 = vmatpush.msra.mxu0 0.0
        %733 = vmatpush.msra.mxu0 0.0
        %734 = vmatpush.msra.mxu0 0.0
        %735 = vmatpush.msra.mxu0 0.0
        %736 = vmatpush.msra.mxu0 0.0
        %737 = vmatpush.msra.mxu0 0.0
        %738 = vmatpush.msra.mxu0 0.0
        %739 = vmatpush.msra.mxu0 %v718
        %740 = vmatpush.msra.mxu0 %v717
        %741 = vmatpush.msra.mxu0 %v716
        %742 = vmatpush.msra.mxu0 %v715
        %743 = vmatmul.f32.gmra.mxu0 %v725
        %v744 = vpop.f32.mrf.mxu0
        %v745 = vadd.f32 %v721, %v744
        %746 = vdwg.mxu0
        %748 = vrot.lane.b32.xlu0 %v745, 120
        %v749 = vpop.permute.xlu0 %748
        %750 = vrot.lane.b32.xlu0 %v745, 112
        %v751 = vpop.permute.xlu0 %750
        %752 = vrot.lane.b32.xlu0 %v745, 104
        %v753 = vpop.permute.xlu0 %752
        %v754 = vld [vmem:[#allocation2] sm:$0xff]
        %v755 = vld [vmem:[#allocation2 + $0x8] sm:$0xff]
        %v756 = vld [vmem:[#allocation2 + $0x10] sm:$0xff]
        %v757 = vld [vmem:[#allocation2 + $0x18] sm:$0xff]
        %v758 = vld [vmem:[#allocation2 + $0x20] sm:$0xff]
        %v759 = vld [vmem:[#allocation2 + $0x28] sm:$0xff]
        %v760 = vld [vmem:[#allocation2 + $0x30] sm:$0xff]
        %v761 = vld [vmem:[#allocation2 + $0x38] sm:$0xff]
        %vm762 = vcmask 64512
        %v764 = vsel %vm762, %v754, 0
        %v767 = vsel %vm762, %v755, 0
        %v769 = vsel %vm762, %v745, 0
        %771 = vmatpush.xpose.msra.mxu0 0.0
        %772 = vmatpush.xpose.msra.mxu0 0.0
        %773 = vmatpush.xpose.msra.mxu0 0.0
        %774 = vmatpush.xpose.msra.mxu0 0.0
        %775 = vmatpush.xpose.msra.mxu0 0.0
        %776 = vmatpush.xpose.msra.mxu0 0.0
        %777 = vmatpush.xpose.msra.mxu0 0.0
        %778 = vmatpush.xpose.msra.mxu0 0.0
        %779 = vmatpush.xpose.msra.mxu0 0.0
        %780 = vmatpush.xpose.msra.mxu0 0.0
        %781 = vmatpush.xpose.msra.mxu0 0.0
        %782 = vmatpush.xpose.msra.mxu0 0.0
        %783 = vmatpush.xpose.msra.mxu0 0.0
        %784 = vmatpush.xpose.msra.mxu0 0.0
        %785 = vmatpush.xpose.msra.mxu0 0.0
        %786 = vmatpush.xpose.msra.mxu0 %v769
        %787 = vmatmul.f32.gmra.mxu0 %v764
        %v788 = vpop.f32.mrf.mxu0
        %v789 = vadd.f32 0.0, %v788
        %790 = vmatmul.f32.gmra.mxu0 %v767
        %v791 = vpop.f32.mrf.mxu0
        %v792 = vadd.f32 0.0, %v791
        %793 = vdwg.mxu0
        %v795 = vsel %vm762, %v756, 0
        %v798 = vsel %vm762, %v757, 0
        %v800 = vsel %vm762, %v749, 0
        %802 = vmatpush.xpose.msra.mxu0 0.0
        %803 = vmatpush.xpose.msra.mxu0 0.0
        %804 = vmatpush.xpose.msra.mxu0 0.0
        %805 = vmatpush.xpose.msra.mxu0 0.0
        %806 = vmatpush.xpose.msra.mxu0 0.0
        %807 = vmatpush.xpose.msra.mxu0 0.0
        %808 = vmatpush.xpose.msra.mxu0 0.0
        %809 = vmatpush.xpose.msra.mxu0 0.0
        %810 = vmatpush.xpose.msra.mxu0 0.0
        %811 = vmatpush.xpose.msra.mxu0 0.0
        %812 = vmatpush.xpose.msra.mxu0 0.0
        %813 = vmatpush.xpose.msra.mxu0 0.0
        %814 = vmatpush.xpose.msra.mxu0 0.0
        %815 = vmatpush.xpose.msra.mxu0 0.0
        %816 = vmatpush.xpose.msra.mxu0 0.0
        %817 = vmatpush.xpose.msra.mxu0 %v800
        %818 = vmatmul.f32.gmra.mxu0 %v795
        %v819 = vpop.f32.mrf.mxu0
        %v820 = vadd.f32 0.0, %v819
        %821 = vmatmul.f32.gmra.mxu0 %v798
        %v822 = vpop.f32.mrf.mxu0
        %v823 = vadd.f32 0.0, %v822
        %824 = vdwg.mxu0
        %v826 = vsel %vm762, %v758, 0
        %v829 = vsel %vm762, %v759, 0
        %v831 = vsel %vm762, %v751, 0
        %833 = vmatpush.xpose.msra.mxu0 0.0
        %834 = vmatpush.xpose.msra.mxu0 0.0
        %835 = vmatpush.xpose.msra.mxu0 0.0
        %836 = vmatpush.xpose.msra.mxu0 0.0
        %837 = vmatpush.xpose.msra.mxu0 0.0
        %838 = vmatpush.xpose.msra.mxu0 0.0
        %839 = vmatpush.xpose.msra.mxu0 0.0
        %840 = vmatpush.xpose.msra.mxu0 0.0
        %841 = vmatpush.xpose.msra.mxu0 0.0
        %842 = vmatpush.xpose.msra.mxu0 0.0
        %843 = vmatpush.xpose.msra.mxu0 0.0
        %844 = vmatpush.xpose.msra.mxu0 0.0
        %845 = vmatpush.xpose.msra.mxu0 0.0
        %846 = vmatpush.xpose.msra.mxu0 0.0
        %847 = vmatpush.xpose.msra.mxu0 0.0
        %848 = vmatpush.xpose.msra.mxu0 %v831
        %849 = vmatmul.f32.gmra.mxu0 %v826
        %v850 = vpop.f32.mrf.mxu0
        %v851 = vadd.f32 0.0, %v850
        %852 = vmatmul.f32.gmra.mxu0 %v829
        %v853 = vpop.f32.mrf.mxu0
        %v854 = vadd.f32 0.0, %v853
        %855 = vdwg.mxu0
        %v857 = vsel %vm762, %v760, 0
        %v860 = vsel %vm762, %v761, 0
        %v862 = vsel %vm762, %v753, 0
        %864 = vmatpush.xpose.msra.mxu0 0.0
        %865 = vmatpush.xpose.msra.mxu0 0.0
        %866 = vmatpush.xpose.msra.mxu0 0.0
        %867 = vmatpush.xpose.msra.mxu0 0.0
        %868 = vmatpush.xpose.msra.mxu0 0.0
        %869 = vmatpush.xpose.msra.mxu0 0.0
        %870 = vmatpush.xpose.msra.mxu0 0.0
        %871 = vmatpush.xpose.msra.mxu0 0.0
        %872 = vmatpush.xpose.msra.mxu0 0.0
        %873 = vmatpush.xpose.msra.mxu0 0.0
        %874 = vmatpush.xpose.msra.mxu0 0.0
        %875 = vmatpush.xpose.msra.mxu0 0.0
        %876 = vmatpush.xpose.msra.mxu0 0.0
        %877 = vmatpush.xpose.msra.mxu0 0.0
        %878 = vmatpush.xpose.msra.mxu0 0.0
        %879 = vmatpush.xpose.msra.mxu0 %v862
        %880 = vmatmul.f32.gmra.mxu0 %v857
        %v881 = vpop.f32.mrf.mxu0
        %v882 = vadd.f32 0.0, %v881
        %883 = vmatmul.f32.gmra.mxu0 %v860
        %v884 = vpop.f32.mrf.mxu0
        %v885 = vadd.f32 0.0, %v884
        %886 = vdwg.mxu0
        %v887 = vld [vmem:[#allocation3] sm:$0xff]
        %v888 = vld [vmem:[#allocation3 + $0x8] sm:$0xff]
        %v889 = vld [vmem:[#allocation3 + $0x10] sm:$0xff]
        %v890 = vld [vmem:[#allocation3 + $0x18] sm:$0xff]
        %v891 = vld [vmem:[#allocation3 + $0x20] sm:$0xff]
        %v892 = vld [vmem:[#allocation3 + $0x28] sm:$0xff]
        %v893 = vld [vmem:[#allocation3 + $0x30] sm:$0xff]
        %v894 = vld [vmem:[#allocation3 + $0x38] sm:$0xff]
        %v895 = vsel %vm762, %v789, -inf
        %896 = vmax.xlane.f32.xlu0 %v895
        %v897 = vpop.xlane.xlu0 %896
        %v898 = vsel %vm762, %v792, -inf
        %899 = vmax.xlane.f32.xlu0 %v898
        %v900 = vpop.xlane.xlu0 %899
        %v901 = vsel %vm762, %v820, -inf
        %902 = vmax.xlane.f32.xlu0 %v901
        %v903 = vpop.xlane.xlu0 %902
        %v904 = vsel %vm762, %v823, -inf
        %905 = vmax.xlane.f32.xlu0 %v904
        %v906 = vpop.xlane.xlu0 %905
        %v907 = vsel %vm762, %v851, -inf
        %908 = vmax.xlane.f32.xlu0 %v907
        %v909 = vpop.xlane.xlu0 %908
        %v910 = vsel %vm762, %v854, -inf
        %911 = vmax.xlane.f32.xlu0 %v910
        %v912 = vpop.xlane.xlu0 %911
        %v913 = vsel %vm762, %v882, -inf
        %914 = vmax.xlane.f32.xlu0 %v913
        %v915 = vpop.xlane.xlu0 %914
        %v916 = vsel %vm762, %v885, -inf
        %917 = vmax.xlane.f32.xlu0 %v916
        %v918 = vpop.xlane.xlu0 %917
        %v919 = vmax.f32 %v887, %v897
        %v920 = vmax.f32 %v888, %v900
        %v921 = vmax.f32 %v889, %v903
        %v922 = vmax.f32 %v890, %v906
        %v923 = vmax.f32 %v891, %v909
        %v924 = vmax.f32 %v892, %v912
        %v925 = vmax.f32 %v893, %v915
        %v926 = vmax.f32 %v894, %v918
        %v927 = vsub.f32 %v887, %v919
        %v928 = vsub.f32 %v888, %v920
        %v929 = vsub.f32 %v889, %v921
        %v930 = vsub.f32 %v890, %v922
        %v931 = vsub.f32 %v891, %v923
        %v932 = vsub.f32 %v892, %v924
        %v933 = vsub.f32 %v893, %v925
        %v934 = vsub.f32 %v894, %v926
        %v935 = vmul.f32 %v927, 1.442695
        %v936 = vpow.pop %v935
        %v937 = vmul.f32 %v928, 1.442695
        %v938 = vpow.pop %v937
        %v939 = vmul.f32 %v929, 1.442695
        %v940 = vpow.pop %v939
        %v941 = vmul.f32 %v930, 1.442695
        %v942 = vpow.pop %v941
        %v943 = vmul.f32 %v931, 1.442695
        %v944 = vpow.pop %v943
        %v945 = vmul.f32 %v932, 1.442695
        %v946 = vpow.pop %v945
        %v947 = vmul.f32 %v933, 1.442695
        %v948 = vpow.pop %v947
        %v949 = vmul.f32 %v934, 1.442695
        %v950 = vpow.pop %v949
        %952 = vset.pattern.permute.xlu0 0
        %953 = vperm.xlu0 %952, %v919
        %v954 = vpop.permute.xlu0 %953
        %957 = vset.pattern.permute.xlu0 0
        %958 = vperm.xlu0 %957, %v920
        %v959 = vpop.permute.xlu0 %958
        %962 = vset.pattern.permute.xlu0 0
        %963 = vperm.xlu0 %962, %v921
        %v964 = vpop.permute.xlu0 %963
        %967 = vset.pattern.permute.xlu0 0
        %968 = vperm.xlu0 %967, %v922
        %v969 = vpop.permute.xlu0 %968
        %972 = vset.pattern.permute.xlu0 0
        %973 = vperm.xlu0 %972, %v923
        %v974 = vpop.permute.xlu0 %973
        %977 = vset.pattern.permute.xlu0 0
        %978 = vperm.xlu0 %977, %v924
        %v979 = vpop.permute.xlu0 %978
        %982 = vset.pattern.permute.xlu0 0
        %983 = vperm.xlu0 %982, %v925
        %v984 = vpop.permute.xlu0 %983
        %987 = vset.pattern.permute.xlu0 0
        %988 = vperm.xlu0 %987, %v926
        %v989 = vpop.permute.xlu0 %988
        %v991 = vsub.f32 %v789, %v954
        %v992 = vsub.f32 %v792, %v959
        %v993 = vsub.f32 %v820, %v964
        %v994 = vsub.f32 %v823, %v969
        %v995 = vsub.f32 %v851, %v974
        %v996 = vsub.f32 %v854, %v979
        %v997 = vsub.f32 %v882, %v984
        %v998 = vsub.f32 %v885, %v989
        %v999 = vmul.f32 %v991, 1.442695
        %v1000 = vpow.pop %v999
        %v1001 = vmul.f32 %v992, 1.442695
        %v1002 = vpow.pop %v1001
        %v1003 = vmul.f32 %v993, 1.442695
        %v1004 = vpow.pop %v1003
        %v1005 = vmul.f32 %v994, 1.442695
        %v1006 = vpow.pop %v1005
        %v1007 = vmul.f32 %v995, 1.442695
        %v1008 = vpow.pop %v1007
        %v1009 = vmul.f32 %v996, 1.442695
        %v1010 = vpow.pop %v1009
        %v1011 = vmul.f32 %v997, 1.442695
        %v1012 = vpow.pop %v1011
        %v1013 = vmul.f32 %v998, 1.442695
        %v1014 = vpow.pop %v1013
        %v1015 = vld [vmem:[#allocation4] sm:$0xff]
        %v1016 = vld [vmem:[#allocation4 + $0x8] sm:$0xff]
        %v1017 = vld [vmem:[#allocation4 + $0x10] sm:$0xff]
        %v1018 = vld [vmem:[#allocation4 + $0x18] sm:$0xff]
        %v1019 = vld [vmem:[#allocation4 + $0x20] sm:$0xff]
        %v1020 = vld [vmem:[#allocation4 + $0x28] sm:$0xff]
        %v1021 = vld [vmem:[#allocation4 + $0x30] sm:$0xff]
        %v1022 = vld [vmem:[#allocation4 + $0x38] sm:$0xff]
        %v1023 = vmul.f32 %v936, %v1015
        %v1024 = vmul.f32 %v938, %v1016
        %v1025 = vmul.f32 %v940, %v1017
        %v1026 = vmul.f32 %v942, %v1018
        %v1027 = vmul.f32 %v944, %v1019
        %v1028 = vmul.f32 %v946, %v1020
        %v1029 = vmul.f32 %v948, %v1021
        %v1030 = vmul.f32 %v950, %v1022
        %v1031 = vsel %vm762, %v1000, 0.0
        %1032 = vadd.xlane.f32.xlu0 %v1031
        %v1033 = vpop.xlane.xlu0 %1032
        %v1034 = vsel %vm762, %v1002, 0.0
        %1035 = vadd.xlane.f32.xlu0 %v1034
        %v1036 = vpop.xlane.xlu0 %1035
        %v1037 = vsel %vm762, %v1004, 0.0
        %1038 = vadd.xlane.f32.xlu0 %v1037
        %v1039 = vpop.xlane.xlu0 %1038
        %v1040 = vsel %vm762, %v1006, 0.0
        %1041 = vadd.xlane.f32.xlu0 %v1040
        %v1042 = vpop.xlane.xlu0 %1041
        %v1043 = vsel %vm762, %v1008, 0.0
        %1044 = vadd.xlane.f32.xlu0 %v1043
        %v1045 = vpop.xlane.xlu0 %1044
        %v1046 = vsel %vm762, %v1010, 0.0
        %1047 = vadd.xlane.f32.xlu0 %v1046
        %v1048 = vpop.xlane.xlu0 %1047
        %v1049 = vsel %vm762, %v1012, 0.0
        %1050 = vadd.xlane.f32.xlu0 %v1049
        %v1051 = vpop.xlane.xlu0 %1050
        %v1052 = vsel %vm762, %v1014, 0.0
        %1053 = vadd.xlane.f32.xlu0 %v1052
        %v1054 = vpop.xlane.xlu0 %1053
        %v1055 = vadd.f32 %v1023, %v1033
        %v1056 = vadd.f32 %v1024, %v1036
        %v1057 = vadd.f32 %v1025, %v1039
        %v1058 = vadd.f32 %v1026, %v1042
        %v1059 = vadd.f32 %v1027, %v1045
        %v1060 = vadd.f32 %v1028, %v1048
        %v1061 = vadd.f32 %v1029, %v1051
        %v1062 = vadd.f32 %v1030, %v1054
        %vm1063 = vcmask 7168
        %1064 = vst.msk [vmem:[#allocation4] sm:$0xff] %vm1063, %v1055
        %1065 = vst.msk [vmem:[#allocation4 + $0x8] sm:$0xff] %vm1063, %v1056
        %1066 = vst.msk [vmem:[#allocation4 + $0x10] sm:$0xff] %vm1063, %v1057
        %1067 = vst.msk [vmem:[#allocation4 + $0x18] sm:$0xff] %vm1063, %v1058
        %1068 = vst.msk [vmem:[#allocation4 + $0x20] sm:$0xff] %vm1063, %v1059
        %1069 = vst.msk [vmem:[#allocation4 + $0x28] sm:$0xff] %vm1063, %v1060
        %1070 = vst.msk [vmem:[#allocation4 + $0x30] sm:$0xff] %vm1063, %v1061
        %1071 = vst.msk [vmem:[#allocation4 + $0x38] sm:$0xff] %vm1063, %v1062
        %v1072 = vld [vmem:[#allocation5] sm:$0xff]
        %v1073 = vld [vmem:[#allocation5 + $0x8] sm:$0xff]
        %v1074 = vld [vmem:[#allocation5 + $0x10] sm:$0xff]
        %v1075 = vld [vmem:[#allocation5 + $0x18] sm:$0xff]
        %v1076 = vld [vmem:[#allocation5 + $0x20] sm:$0xff]
        %v1077 = vld [vmem:[#allocation5 + $0x28] sm:$0xff]
        %v1078 = vld [vmem:[#allocation5 + $0x30] sm:$0xff]
        %v1079 = vld [vmem:[#allocation5 + $0x38] sm:$0xff]
        %1081 = vset.pattern.permute.xlu0 0
        %1082 = vperm.xlu0 %1081, %v936
        %v1083 = vpop.permute.xlu0 %1082
        %1086 = vset.pattern.permute.xlu0 0
        %1087 = vperm.xlu0 %1086, %v938
        %v1088 = vpop.permute.xlu0 %1087
        %1091 = vset.pattern.permute.xlu0 0
        %1092 = vperm.xlu0 %1091, %v940
        %v1093 = vpop.permute.xlu0 %1092
        %1096 = vset.pattern.permute.xlu0 0
        %1097 = vperm.xlu0 %1096, %v942
        %v1098 = vpop.permute.xlu0 %1097
        %1101 = vset.pattern.permute.xlu0 0
        %1102 = vperm.xlu0 %1101, %v944
        %v1103 = vpop.permute.xlu0 %1102
        %1106 = vset.pattern.permute.xlu0 0
        %1107 = vperm.xlu0 %1106, %v946
        %v1108 = vpop.permute.xlu0 %1107
        %1111 = vset.pattern.permute.xlu0 0
        %1112 = vperm.xlu0 %1111, %v948
        %v1113 = vpop.permute.xlu0 %1112
        %1116 = vset.pattern.permute.xlu0 0
        %1117 = vperm.xlu0 %1116, %v950
        %v1118 = vpop.permute.xlu0 %1117
        %v1120 = vmul.f32 %v1083, %v1072
        %v1121 = vmul.f32 %v1088, %v1073
        %v1122 = vmul.f32 %v1093, %v1074
        %v1123 = vmul.f32 %v1098, %v1075
        %v1124 = vmul.f32 %v1103, %v1076
        %v1125 = vmul.f32 %v1108, %v1077
        %v1126 = vmul.f32 %v1113, %v1078
        %v1127 = vmul.f32 %v1118, %v1079
        %1128 = vrot.lane.b32.xlu0 %v745, 96
        %v1129 = vpop.permute.xlu0 %1128
        %v1132 = vsel %vm762, %v1000, 0
        %v1135 = vsel %vm762, %v1002, 0
        %1137 = vmatpush.msra.mxu0 0.0
        %1138 = vmatpush.msra.mxu0 0.0
        %1139 = vmatpush.msra.mxu0 0.0
        %1140 = vmatpush.msra.mxu0 0.0
        %1141 = vmatpush.msra.mxu0 0.0
        %1142 = vmatpush.msra.mxu0 0.0
        %1143 = vmatpush.msra.mxu0 0.0
        %1144 = vmatpush.msra.mxu0 0.0
        %1145 = vmatpush.msra.mxu0 0.0
        %1146 = vmatpush.msra.mxu0 0.0
        %1147 = vmatpush.msra.mxu0 0.0
        %1148 = vmatpush.msra.mxu0 0.0
        %1149 = vmatpush.msra.mxu0 0.0
        %1150 = vmatpush.msra.mxu0 0.0
        %1151 = vmatpush.msra.mxu0 0.0
        %1152 = vmatpush.msra.mxu0 %v1129
        %1153 = vmatmul.f32.gmra.mxu0 %v1132
        %v1154 = vpop.f32.mrf.mxu0
        %v1155 = vadd.f32 0.0, %v1154
        %1156 = vmatmul.f32.gmra.mxu0 %v1135
        %v1157 = vpop.f32.mrf.mxu0
        %v1158 = vadd.f32 0.0, %v1157
        %1159 = vdwg.mxu0
        %1160 = vrot.lane.b32.xlu0 %v749, 96
        %v1161 = vpop.permute.xlu0 %1160
        %v1164 = vsel %vm762, %v1004, 0
        %v1167 = vsel %vm762, %v1006, 0
        %1169 = vmatpush.msra.mxu0 0.0
        %1170 = vmatpush.msra.mxu0 0.0
        %1171 = vmatpush.msra.mxu0 0.0
        %1172 = vmatpush.msra.mxu0 0.0
        %1173 = vmatpush.msra.mxu0 0.0
        %1174 = vmatpush.msra.mxu0 0.0
        %1175 = vmatpush.msra.mxu0 0.0
        %1176 = vmatpush.msra.mxu0 0.0
        %1177 = vmatpush.msra.mxu0 0.0
        %1178 = vmatpush.msra.mxu0 0.0
        %1179 = vmatpush.msra.mxu0 0.0
        %1180 = vmatpush.msra.mxu0 0.0
        %1181 = vmatpush.msra.mxu0 0.0
        %1182 = vmatpush.msra.mxu0 0.0
        %1183 = vmatpush.msra.mxu0 0.0
        %1184 = vmatpush.msra.mxu0 %v1161
        %1185 = vmatmul.f32.gmra.mxu0 %v1164
        %v1186 = vpop.f32.mrf.mxu0
        %v1187 = vadd.f32 0.0, %v1186
        %1188 = vmatmul.f32.gmra.mxu0 %v1167
        %v1189 = vpop.f32.mrf.mxu0
        %v1190 = vadd.f32 0.0, %v1189
        %1191 = vdwg.mxu0
        %1192 = vrot.lane.b32.xlu0 %v751, 96
        %v1193 = vpop.permute.xlu0 %1192
        %v1196 = vsel %vm762, %v1008, 0
        %v1199 = vsel %vm762, %v1010, 0
        %1201 = vmatpush.msra.mxu0 0.0
        %1202 = vmatpush.msra.mxu0 0.0
        %1203 = vmatpush.msra.mxu0 0.0
        %1204 = vmatpush.msra.mxu0 0.0
        %1205 = vmatpush.msra.mxu0 0.0
        %1206 = vmatpush.msra.mxu0 0.0
        %1207 = vmatpush.msra.mxu0 0.0
        %1208 = vmatpush.msra.mxu0 0.0
        %1209 = vmatpush.msra.mxu0 0.0
        %1210 = vmatpush.msra.mxu0 0.0
        %1211 = vmatpush.msra.mxu0 0.0
        %1212 = vmatpush.msra.mxu0 0.0
        %1213 = vmatpush.msra.mxu0 0.0
        %1214 = vmatpush.msra.mxu0 0.0
        %1215 = vmatpush.msra.mxu0 0.0
        %1216 = vmatpush.msra.mxu0 %v1193
        %1217 = vmatmul.f32.gmra.mxu0 %v1196
        %v1218 = vpop.f32.mrf.mxu0
        %v1219 = vadd.f32 0.0, %v1218
        %1220 = vmatmul.f32.gmra.mxu0 %v1199
        %v1221 = vpop.f32.mrf.mxu0
        %v1222 = vadd.f32 0.0, %v1221
        %1223 = vdwg.mxu0
        %1224 = vrot.lane.b32.xlu0 %v753, 96
        %v1225 = vpop.permute.xlu0 %1224
        %v1228 = vsel %vm762, %v1012, 0
        %v1231 = vsel %vm762, %v1014, 0
        %1233 = vmatpush.msra.mxu0 0.0
        %1234 = vmatpush.msra.mxu0 0.0
        %1235 = vmatpush.msra.mxu0 0.0
        %1236 = vmatpush.msra.mxu0 0.0
        %1237 = vmatpush.msra.mxu0 0.0
        %1238 = vmatpush.msra.mxu0 0.0
        %1239 = vmatpush.msra.mxu0 0.0
        %1240 = vmatpush.msra.mxu0 0.0
        %1241 = vmatpush.msra.mxu0 0.0
        %1242 = vmatpush.msra.mxu0 0.0
        %1243 = vmatpush.msra.mxu0 0.0
        %1244 = vmatpush.msra.mxu0 0.0
        %1245 = vmatpush.msra.mxu0 0.0
        %1246 = vmatpush.msra.mxu0 0.0
        %1247 = vmatpush.msra.mxu0 0.0
        %1248 = vmatpush.msra.mxu0 %v1225
        %1249 = vmatmul.f32.gmra.mxu0 %v1228
        %v1250 = vpop.f32.mrf.mxu0
        %v1251 = vadd.f32 0.0, %v1250
        %1252 = vmatmul.f32.gmra.mxu0 %v1231
        %v1253 = vpop.f32.mrf.mxu0
        %v1254 = vadd.f32 0.0, %v1253
        %1255 = vdwg.mxu0
        %v1256 = vadd.f32 %v1120, %v1155
        %v1257 = vadd.f32 %v1121, %v1158
        %v1258 = vadd.f32 %v1122, %v1187
        %v1259 = vadd.f32 %v1123, %v1190
        %v1260 = vadd.f32 %v1124, %v1219
        %v1261 = vadd.f32 %v1125, %v1222
        %v1262 = vadd.f32 %v1126, %v1251
        %v1263 = vadd.f32 %v1127, %v1254
        %1264 = vst.msk [vmem:[#allocation5] sm:$0xff] %vm762, %v1256
        %1265 = vst.msk [vmem:[#allocation5 + $0x8] sm:$0xff] %vm762, %v1257
        %1266 = vst.msk [vmem:[#allocation5 + $0x10] sm:$0xff] %vm762, %v1258
        %1267 = vst.msk [vmem:[#allocation5 + $0x18] sm:$0xff] %vm762, %v1259
        %1268 = vst.msk [vmem:[#allocation5 + $0x20] sm:$0xff] %vm762, %v1260
        %1269 = vst.msk [vmem:[#allocation5 + $0x28] sm:$0xff] %vm762, %v1261
        %1270 = vst.msk [vmem:[#allocation5 + $0x30] sm:$0xff] %vm762, %v1262
        %1271 = vst.msk [vmem:[#allocation5 + $0x38] sm:$0xff] %vm762, %v1263
        %1272 = vst.msk [vmem:[#allocation3] sm:$0xff] %vm1063, %v919
        %1273 = vst.msk [vmem:[#allocation3 + $0x8] sm:$0xff] %vm1063, %v920
        %1274 = vst.msk [vmem:[#allocation3 + $0x10] sm:$0xff] %vm1063, %v921
        %1275 = vst.msk [vmem:[#allocation3 + $0x18] sm:$0xff] %vm1063, %v922
        %1276 = vst.msk [vmem:[#allocation3 + $0x20] sm:$0xff] %vm1063, %v923
        %1277 = vst.msk [vmem:[#allocation3 + $0x28] sm:$0xff] %vm1063, %v924
        %1278 = vst.msk [vmem:[#allocation3 + $0x30] sm:$0xff] %vm1063, %v925
        %1279 = vst.msk [vmem:[#allocation3 + $0x38] sm:$0xff] %vm1063, %v926
        %p1280 = scmp.eq.s32.totalorder %s37, 1
        // Predicated region
        $region101: #{tpu_custom_call.1} parent=83 // pred_check
          %p1281 = pneg %p1280
        $region102: #{tpu_custom_call.1} parent=83 // pred_check_branch
          %1283 = sbr.rel (%p1281) target = $region104
        $region103: #{tpu_custom_call.1} parent=83 // pred_region
          %v1284 = vld [vmem:[#allocation5] sm:$0xff]
          %v1285 = vld [vmem:[#allocation5 + $0x8] sm:$0xff]
          %v1286 = vld [vmem:[#allocation5 + $0x10] sm:$0xff]
          %v1287 = vld [vmem:[#allocation5 + $0x18] sm:$0xff]
          %v1288 = vld [vmem:[#allocation5 + $0x20] sm:$0xff]
          %v1289 = vld [vmem:[#allocation5 + $0x28] sm:$0xff]
          %v1290 = vld [vmem:[#allocation5 + $0x30] sm:$0xff]
          %v1291 = vld [vmem:[#allocation5 + $0x38] sm:$0xff]
          %v1292 = vld [vmem:[#allocation4] sm:$0xff]
          %v1293 = vld [vmem:[#allocation4 + $0x8] sm:$0xff]
          %v1294 = vld [vmem:[#allocation4 + $0x10] sm:$0xff]
          %v1295 = vld [vmem:[#allocation4 + $0x18] sm:$0xff]
          %v1296 = vld [vmem:[#allocation4 + $0x20] sm:$0xff]
          %v1297 = vld [vmem:[#allocation4 + $0x28] sm:$0xff]
          %v1298 = vld [vmem:[#allocation4 + $0x30] sm:$0xff]
          %v1299 = vld [vmem:[#allocation4 + $0x38] sm:$0xff]
          %1301 = vset.pattern.permute.xlu0 0
          %1302 = vperm.xlu0 %1301, %v1292
          %v1303 = vpop.permute.xlu0 %1302
          %1306 = vset.pattern.permute.xlu0 0
          %1307 = vperm.xlu0 %1306, %v1293
          %v1308 = vpop.permute.xlu0 %1307
          %1311 = vset.pattern.permute.xlu0 0
          %1312 = vperm.xlu0 %1311, %v1294
          %v1313 = vpop.permute.xlu0 %1312
          %1316 = vset.pattern.permute.xlu0 0
          %1317 = vperm.xlu0 %1316, %v1295
          %v1318 = vpop.permute.xlu0 %1317
          %1321 = vset.pattern.permute.xlu0 0
          %1322 = vperm.xlu0 %1321, %v1296
          %v1323 = vpop.permute.xlu0 %1322
          %1326 = vset.pattern.permute.xlu0 0
          %1327 = vperm.xlu0 %1326, %v1297
          %v1328 = vpop.permute.xlu0 %1327
          %1331 = vset.pattern.permute.xlu0 0
          %1332 = vperm.xlu0 %1331, %v1298
          %v1333 = vpop.permute.xlu0 %1332
          %1336 = vset.pattern.permute.xlu0 0
          %1337 = vperm.xlu0 %1336, %v1299
          %v1338 = vpop.permute.xlu0 %1337
          %v1340 = vrcp.pop %v1303
          %v1341 = vmul.f32 %v1303, %v1340
          %v1342 = vsub.f32 1.0, %v1341
          %v1343 = vmul.f32 %v1340, %v1342
          %v1344 = vadd.f32 %v1340, %v1343
          %vm1345 = vweird.f32 %v1303
          %vm1346 = vweird.f32 %v1340
          %vm1347 = vmor %vm1345, %vm1346
          %v1348 = vsel %vm1347, %v1340, %v1344
          %v1349 = vand.u32 2147483647, %v1303
          %vm1350 = vcmp.eq.f32.partialorder %v1349, 8.507059e+37
          %v1351 = vand.u32 %v1303, 2147483648
          %v1352 = vor.u32 1.1754944e-38, %v1351
          %v1353 = vsel %vm1350, %v1352, %v1348
          %v1354 = vmul.f32 %v1284, %v1353
          %v1355 = vrcp.pop %v1308
          %v1356 = vmul.f32 %v1308, %v1355
          %v1357 = vsub.f32 1.0, %v1356
          %v1358 = vmul.f32 %v1355, %v1357
          %v1359 = vadd.f32 %v1355, %v1358
          %vm1360 = vweird.f32 %v1308
          %vm1361 = vweird.f32 %v1355
          %vm1362 = vmor %vm1360, %vm1361
          %v1363 = vsel %vm1362, %v1355, %v1359
          %v1364 = vand.u32 2147483647, %v1308
          %vm1365 = vcmp.eq.f32.partialorder %v1364, 8.507059e+37
          %v1366 = vand.u32 %v1308, 2147483648
          %v1367 = vor.u32 1.1754944e-38, %v1366
          %v1368 = vsel %vm1365, %v1367, %v1363
          %v1369 = vmul.f32 %v1285, %v1368
          %v1370 = vrcp.pop %v1313
          %v1371 = vmul.f32 %v1313, %v1370
          %v1372 = vsub.f32 1.0, %v1371
          %v1373 = vmul.f32 %v1370, %v1372
          %v1374 = vadd.f32 %v1370, %v1373
          %vm1375 = vweird.f32 %v1313
          %vm1376 = vweird.f32 %v1370
          %vm1377 = vmor %vm1375, %vm1376
          %v1378 = vsel %vm1377, %v1370, %v1374
          %v1379 = vand.u32 2147483647, %v1313
          %vm1380 = vcmp.eq.f32.partialorder %v1379, 8.507059e+37
          %v1381 = vand.u32 %v1313, 2147483648
          %v1382 = vor.u32 1.1754944e-38, %v1381
          %v1383 = vsel %vm1380, %v1382, %v1378
          %v1384 = vmul.f32 %v1286, %v1383
          %v1385 = vrcp.pop %v1318
          %v1386 = vmul.f32 %v1318, %v1385
          %v1387 = vsub.f32 1.0, %v1386
          %v1388 = vmul.f32 %v1385, %v1387
          %v1389 = vadd.f32 %v1385, %v1388
          %vm1390 = vweird.f32 %v1318
          %vm1391 = vweird.f32 %v1385
          %vm1392 = vmor %vm1390, %vm1391
          %v1393 = vsel %vm1392, %v1385, %v1389
          %v1394 = vand.u32 2147483647, %v1318
          %vm1395 = vcmp.eq.f32.partialorder %v1394, 8.507059e+37
          %v1396 = vand.u32 %v1318, 2147483648
          %v1397 = vor.u32 1.1754944e-38, %v1396
          %v1398 = vsel %vm1395, %v1397, %v1393
          %v1399 = vmul.f32 %v1287, %v1398
          %v1400 = vrcp.pop %v1323
          %v1401 = vmul.f32 %v1323, %v1400
          %v1402 = vsub.f32 1.0, %v1401
          %v1403 = vmul.f32 %v1400, %v1402
          %v1404 = vadd.f32 %v1400, %v1403
          %vm1405 = vweird.f32 %v1323
          %vm1406 = vweird.f32 %v1400
          %vm1407 = vmor %vm1405, %vm1406
          %v1408 = vsel %vm1407, %v1400, %v1404
          %v1409 = vand.u32 2147483647, %v1323
          %vm1410 = vcmp.eq.f32.partialorder %v1409, 8.507059e+37
          %v1411 = vand.u32 %v1323, 2147483648
          %v1412 = vor.u32 1.1754944e-38, %v1411
          %v1413 = vsel %vm1410, %v1412, %v1408
          %v1414 = vmul.f32 %v1288, %v1413
          %v1415 = vrcp.pop %v1328
          %v1416 = vmul.f32 %v1328, %v1415
          %v1417 = vsub.f32 1.0, %v1416
          %v1418 = vmul.f32 %v1415, %v1417
          %v1419 = vadd.f32 %v1415, %v1418
          %vm1420 = vweird.f32 %v1328
          %vm1421 = vweird.f32 %v1415
          %vm1422 = vmor %vm1420, %vm1421
          %v1423 = vsel %vm1422, %v1415, %v1419
          %v1424 = vand.u32 2147483647, %v1328
          %vm1425 = vcmp.eq.f32.partialorder %v1424, 8.507059e+37
          %v1426 = vand.u32 %v1328, 2147483648
          %v1427 = vor.u32 1.1754944e-38, %v1426
          %v1428 = vsel %vm1425, %v1427, %v1423
          %v1429 = vmul.f32 %v1289, %v1428
          %v1430 = vrcp.pop %v1333
          %v1431 = vmul.f32 %v1333, %v1430
          %v1432 = vsub.f32 1.0, %v1431
          %v1433 = vmul.f32 %v1430, %v1432
          %v1434 = vadd.f32 %v1430, %v1433
          %vm1435 = vweird.f32 %v1333
          %vm1436 = vweird.f32 %v1430
          %vm1437 = vmor %vm1435, %vm1436
          %v1438 = vsel %vm1437, %v1430, %v1434
          %v1439 = vand.u32 2147483647, %v1333
          %vm1440 = vcmp.eq.f32.partialorder %v1439, 8.507059e+37
          %v1441 = vand.u32 %v1333, 2147483648
          %v1442 = vor.u32 1.1754944e-38, %v1441
          %v1443 = vsel %vm1440, %v1442, %v1438
          %v1444 = vmul.f32 %v1290, %v1443
          %v1445 = vrcp.pop %v1338
          %v1446 = vmul.f32 %v1338, %v1445
          %v1447 = vsub.f32 1.0, %v1446
          %v1448 = vmul.f32 %v1445, %v1447
          %v1449 = vadd.f32 %v1445, %v1448
          %vm1450 = vweird.f32 %v1338
          %vm1451 = vweird.f32 %v1445
          %vm1452 = vmor %vm1450, %vm1451
          %v1453 = vsel %vm1452, %v1445, %v1449
          %v1454 = vand.u32 2147483647, %v1338
          %vm1455 = vcmp.eq.f32.partialorder %v1454, 8.507059e+37
          %v1456 = vand.u32 %v1338, 2147483648
          %v1457 = vor.u32 1.1754944e-38, %v1456
          %v1458 = vsel %vm1455, %v1457, %v1453
          %v1459 = vmul.f32 %v1291, %v1458
          %1462 = vrot.lane.b32.xlu0 %v1384, 8
          %v1463 = vpop.permute.xlu0 %1462
          %1464 = vrot.lane.b32.xlu0 %v1399, 8
          %v1465 = vpop.permute.xlu0 %1464
          %1470 = vrot.lane.b32.xlu0 %v1414, 16
          %v1471 = vpop.permute.xlu0 %1470
          %1472 = vrot.lane.b32.xlu0 %v1429, 16
          %v1473 = vpop.permute.xlu0 %1472
          %1478 = vrot.lane.b32.xlu0 %v1444, 24
          %v1479 = vpop.permute.xlu0 %1478
          %1480 = vrot.lane.b32.xlu0 %v1459, 24
          %v1481 = vpop.permute.xlu0 %1480
          %v1484 = vsel %vm762, %v1354, %v1463
          %v1485 = vsel %vm762, %v1369, %v1465
          %vm1486 = vcmask 130048
          %v1487 = vsel %vm1486, %v1484, %v1471
          %v1488 = vsel %vm1486, %v1485, %v1473
          %vm1489 = vcmask 195584
          %v1490 = vsel %vm1489, %v1487, %v1479
          %v1491 = vsel %vm1489, %v1488, %v1481
          %v1492 = vld [vmem:[%s605] sm:$0xff]
          %v1493 = vld [vmem:[%s605 + $0x8] sm:$0xff]
          %v1494 = vld [vmem:[#allocation9] sm:$0xff]
          %v1495 = vld [vmem:[#allocation9 + $0x8] sm:$0xff]
          %v1496 = vld [vmem:[#allocation9 + $0x10] sm:$0xff]
          %v1497 = vld [vmem:[#allocation9 + $0x18] sm:$0xff]
          %v1498 = vld [vmem:[%s7] sm:$0x1]
          %v1500 = vperm.slane %v1498, 0
          %v1503 = vsel %vm723, %v1490, 0
          %v1506 = vsel %vm723, %v1491, 0
          %1508 = vmatpush.msra.mxu0 0.0
          %1509 = vmatpush.msra.mxu0 0.0
          %1510 = vmatpush.msra.mxu0 0.0
          %1511 = vmatpush.msra.mxu0 0.0
          %1512 = vmatpush.msra.mxu0 0.0
          %1513 = vmatpush.msra.mxu0 0.0
          %1514 = vmatpush.msra.mxu0 0.0
          %1515 = vmatpush.msra.mxu0 0.0
          %1516 = vmatpush.msra.mxu0 0.0
          %1517 = vmatpush.msra.mxu0 0.0
          %1518 = vmatpush.msra.mxu0 0.0
          %1519 = vmatpush.msra.mxu0 0.0
          %1520 = vmatpush.msra.mxu0 %v1497
          %1521 = vmatpush.msra.mxu0 %v1496
          %1522 = vmatpush.msra.mxu0 %v1495
          %1523 = vmatpush.msra.mxu0 %v1494
          %1524 = vmatmul.f32.gmra.mxu0 %v1503
          %v1525 = vpop.f32.mrf.mxu0
          %v1526 = vadd.f32 %v1500, %v1525
          %1527 = vmatmul.f32.gmra.mxu0 %v1506
          %v1528 = vpop.f32.mrf.mxu0
          %v1529 = vadd.f32 %v1500, %v1528
          %1530 = vdwg.mxu0
          %v1531 = vadd.f32 %v1492, %v1526
          %v1532 = vadd.f32 %v1493, %v1529
          %v1533 = vld [vmem:[%s8] sm:$0x1]
          %v1534 = vld [vmem:[%s9] sm:$0x1]
          %v1535 = vsel %vm723, %v1531, 0.0
          %1536 = vadd.xlane.f32.xlu0 %v1535
          %v1537 = vpop.xlane.xlu0 %1536
          %v1538 = vsel %vm723, %v1532, 0.0
          %1539 = vadd.xlane.f32.xlu0 %v1538
          %v1540 = vpop.xlane.xlu0 %1539
          %v1541 = vrcp.pop 32.0
          %v1542 = vmul.f32 32.0, %v1541
          %v1543 = vsub.f32 1.0, %v1542
          %v1544 = vmul.f32 %v1541, %v1543
          %v1545 = vadd.f32 %v1541, %v1544
          %vm1546 = vweird.f32 %v1541
          %v1547 = vsel %vm1546, %v1541, %v1545
          %v1548 = vmul.f32 %v1537, %v1547
          %v1549 = vmul.f32 %v1540, %v1547
          %v1550 = vsub.f32 %v1531, %v1548
          %v1551 = vsub.f32 %v1532, %v1549
          %v1552 = vmul.f32 %v1550, %v1550
          %v1553 = vmul.f32 %v1551, %v1551
          %v1554 = vsel %vm723, %v1552, 0.0
          %1555 = vadd.xlane.f32.xlu0 %v1554
          %v1556 = vpop.xlane.xlu0 %1555
          %v1557 = vsel %vm723, %v1553, 0.0
          %1558 = vadd.xlane.f32.xlu0 %v1557
          %v1559 = vpop.xlane.xlu0 %1558
          %v1560 = vmul.f32 %v1556, %v1547
          %v1561 = vmul.f32 %v1559, %v1547
          %v1562 = vadd.f32 %v1560, 1e-05
          %v1563 = vadd.f32 %v1561, 1e-05
          %v1564 = vrsqrt.pop %v1562
          %v1565 = vmul.f32 %v1564, %v1562
          %v1566 = vmul.f32 %v1565, %v1564
          %v1567 = vmul.f32 0.5, %v1566
          %v1568 = vsub.f32 1.5, %v1567
          %v1569 = vmul.f32 %v1564, %v1568
          %vm1570 = vweird.f32 %v1562
          %vm1571 = vweird.f32 %v1564
          %vm1572 = vmor %vm1570, %vm1571
          %v1573 = vsel %vm1572, %v1564, %v1569
          %v1574 = vrsqrt.pop %v1563
          %v1575 = vmul.f32 %v1574, %v1563
          %v1576 = vmul.f32 %v1575, %v1574
          %v1577 = vmul.f32 0.5, %v1576
          %v1578 = vsub.f32 1.5, %v1577
          %v1579 = vmul.f32 %v1574, %v1578
          %vm1580 = vweird.f32 %v1563
          %vm1581 = vweird.f32 %v1574
          %vm1582 = vmor %vm1580, %vm1581
          %v1583 = vsel %vm1582, %v1574, %v1579
          %v1584 = vmul.f32 %v1550, %v1573
          %v1585 = vmul.f32 %v1551, %v1583
          %v1587 = vperm.slane %v1533, 0
          %v1589 = vmul.f32 %v1584, %v1587
          %v1590 = vmul.f32 %v1585, %v1587
          %v1592 = vperm.slane %v1534, 0
          %v1594 = vadd.f32 %v1589, %v1592
          %v1595 = vadd.f32 %v1590, %v1592
          %v1596 = vld [vmem:[#allocation11] sm:$0xff]
          %v1597 = vld [vmem:[#allocation11 + $0x8] sm:$0xff]
          %v1598 = vld [vmem:[#allocation11 + $0x10] sm:$0xff]
          %v1599 = vld [vmem:[#allocation11 + $0x18] sm:$0xff]
          %v1600 = vld [vmem:[%s11] sm:$0x1]
          %v1602 = vperm.slane %v1600, 0
          %v1605 = vsel %vm723, %v1594, 0
          %v1608 = vsel %vm723, %v1595, 0
          %1610 = vmatpush.msra.mxu0 0.0
          %1611 = vmatpush.msra.mxu0 0.0
          %1612 = vmatpush.msra.mxu0 0.0
          %1613 = vmatpush.msra.mxu0 0.0
          %1614 = vmatpush.msra.mxu0 0.0
          %1615 = vmatpush.msra.mxu0 0.0
          %1616 = vmatpush.msra.mxu0 0.0
          %1617 = vmatpush.msra.mxu0 0.0
          %1618 = vmatpush.msra.mxu0 0.0
          %1619 = vmatpush.msra.mxu0 0.0
          %1620 = vmatpush.msra.mxu0 0.0
          %1621 = vmatpush.msra.mxu0 0.0
          %1622 = vmatpush.msra.mxu0 %v1599
          %1623 = vmatpush.msra.mxu0 %v1598
          %1624 = vmatpush.msra.mxu0 %v1597
          %1625 = vmatpush.msra.mxu0 %v1596
          %1626 = vmatmul.f32.gmra.mxu0 %v1605
          %v1627 = vpop.f32.mrf.mxu0
          %v1628 = vadd.f32 %v1602, %v1627
          %1629 = vmatmul.f32.gmra.mxu0 %v1608
          %v1630 = vpop.f32.mrf.mxu0
          %v1631 = vadd.f32 %v1602, %v1630
          %1632 = vdwg.mxu0
          %v1633 = vmax.f32 %v1628, 0.0
          %v1634 = vmax.f32 %v1631, 0.0
          %v1635 = vld [vmem:[%s12] sm:$0xff]
          %v1636 = vld [vmem:[%s12 + $0x8] sm:$0xff]
          %v1637 = vld [vmem:[%s12 + $0x10] sm:$0xff]
          %v1638 = vld [vmem:[%s12 + $0x18] sm:$0xff]
          %v1639 = vld [vmem:[%s12 + $0x20] sm:$0xff]
          %v1640 = vld [vmem:[%s12 + $0x28] sm:$0xff]
          %v1641 = vld [vmem:[%s12 + $0x30] sm:$0xff]
          %v1642 = vld [vmem:[%s12 + $0x38] sm:$0xff]
          %v1643 = vld [vmem:[%s13] sm:$0x1]
          %v1645 = vperm.slane %v1643, 0
          %vm1647 = vcmask 523264
          %v1649 = vsel %vm1647, %v1633, 0
          %v1652 = vsel %vm1647, %v1634, 0
          %1654 = vmatpush.msra.mxu0 0.0
          %1655 = vmatpush.msra.mxu0 0.0
          %1656 = vmatpush.msra.mxu0 0.0
          %1657 = vmatpush.msra.mxu0 0.0
          %1658 = vmatpush.msra.mxu0 0.0
          %1659 = vmatpush.msra.mxu0 0.0
          %1660 = vmatpush.msra.mxu0 0.0
          %1661 = vmatpush.msra.mxu0 0.0
          %1662 = vmatpush.msra.mxu0 %v1642
          %1663 = vmatpush.msra.mxu0 %v1641
          %1664 = vmatpush.msra.mxu0 %v1640
          %1665 = vmatpush.msra.mxu0 %v1639
          %1666 = vmatpush.msra.mxu0 %v1638
          %1667 = vmatpush.msra.mxu0 %v1637
          %1668 = vmatpush.msra.mxu0 %v1636
          %1669 = vmatpush.msra.mxu0 %v1635
          %1670 = vmatmul.f32.gmra.mxu0 %v1649
          %v1671 = vpop.f32.mrf.mxu0
          %v1672 = vadd.f32 %v1645, %v1671
          %1673 = vmatmul.f32.gmra.mxu0 %v1652
          %v1674 = vpop.f32.mrf.mxu0
          %v1675 = vadd.f32 %v1645, %v1674
          %1676 = vdwg.mxu0
          %v1677 = vadd.f32 %v1594, %v1672
          %v1678 = vadd.f32 %v1595, %v1675
          %v1679 = vld [vmem:[%s14] sm:$0x1]
          %v1680 = vld [vmem:[%s15] sm:$0x1]
          %v1681 = vsel %vm723, %v1677, 0.0
          %1682 = vadd.xlane.f32.xlu0 %v1681
          %v1683 = vpop.xlane.xlu0 %1682
          %v1684 = vsel %vm723, %v1678, 0.0
          %1685 = vadd.xlane.f32.xlu0 %v1684
          %v1686 = vpop.xlane.xlu0 %1685
          %v1687 = vmul.f32 %v1683, %v1547
          %v1688 = vmul.f32 %v1686, %v1547
          %v1689 = vsub.f32 %v1677, %v1687
          %v1690 = vsub.f32 %v1678, %v1688
          %v1691 = vmul.f32 %v1689, %v1689
          %v1692 = vmul.f32 %v1690, %v1690
          %v1693 = vsel %vm723, %v1691, 0.0
          %1694 = vadd.xlane.f32.xlu0 %v1693
          %v1695 = vpop.xlane.xlu0 %1694
          %v1696 = vsel %vm723, %v1692, 0.0
          %1697 = vadd.xlane.f32.xlu0 %v1696
          %v1698 = vpop.xlane.xlu0 %1697
          %v1699 = vmul.f32 %v1695, %v1547
          %v1700 = vmul.f32 %v1698, %v1547
          %v1701 = vadd.f32 %v1699, 1e-05
          %v1702 = vadd.f32 %v1700, 1e-05
          %v1703 = vrsqrt.pop %v1701
          %v1704 = vmul.f32 %v1703, %v1701
          %v1705 = vmul.f32 %v1704, %v1703
          %v1706 = vmul.f32 0.5, %v1705
          %v1707 = vsub.f32 1.5, %v1706
          %v1708 = vmul.f32 %v1703, %v1707
          %vm1709 = vweird.f32 %v1701
          %vm1710 = vweird.f32 %v1703
          %vm1711 = vmor %vm1709, %vm1710
          %v1712 = vsel %vm1711, %v1703, %v1708
          %v1713 = vrsqrt.pop %v1702
          %v1714 = vmul.f32 %v1713, %v1702
          %v1715 = vmul.f32 %v1714, %v1713
          %v1716 = vmul.f32 0.5, %v1715
          %v1717 = vsub.f32 1.5, %v1716
          %v1718 = vmul.f32 %v1713, %v1717
          %vm1719 = vweird.f32 %v1702
          %vm1720 = vweird.f32 %v1713
          %vm1721 = vmor %vm1719, %vm1720
          %v1722 = vsel %vm1721, %v1713, %v1718
          %v1723 = vmul.f32 %v1689, %v1712
          %v1724 = vmul.f32 %v1690, %v1722
          %v1726 = vperm.slane %v1679, 0
          %v1728 = vmul.f32 %v1723, %v1726
          %v1729 = vmul.f32 %v1724, %v1726
          %v1731 = vperm.slane %v1680, 0
          %v1733 = vadd.f32 %v1728, %v1731
          %v1734 = vadd.f32 %v1729, %v1731
          %1735 = vst.msk [vmem:[%s600] sm:$0xff] %vm723, %v1733
          %1736 = vst.msk [vmem:[%s600 + $0x8] sm:$0xff] %vm723, %v1734
        $region104: #{tpu_custom_call.1} parent=83 // pred_fallthru
          _
        %s1737 = sand.u32 %s402, 1
        %s1738 = scalar_lea.sflag [#allocation8], %s1737
        %s1739 = sand.u32 %s402, 1
        %s1740 = smul.addr %s1739, 16
        %s1741 = scalar_lea.vmem [#allocation12], %s1740
        // Predicated region
        $region105: #{tpu_custom_call.1} parent=83 // pred_check
          %p1742 = pneg %p412
        $region106: #{tpu_custom_call.1} parent=83 // pred_check_branch
          %1744 = sbr.rel (%p1742) target = $region108
        $region107: #{tpu_custom_call.1} parent=83 // pred_region
          %s1745 = smul.u32 2, %s36
          %1747 = vsyncadd %s1738, 0
          %s1748 = smul.addr %s1745, 8
          %s1749 = scalar_lea.hbm %s16, %s1748
          %s1750 = sshll.u32 %s1741, 4
          %s1751 = int_to_ptr.vmem [resolvable:$true] %s1750
          %s1752 = sshll.u32 %s1749, 4
          %s1753 = int_to_ptr.hbm [resolvable:$true] %s1752
          %1758 = dma.vmem_to_hbm [thread:$0]  %s1751, 256, %s1753, %s1738, 128, 128, 8
        $region108: #{tpu_custom_call.1} parent=83 // pred_fallthru
          _
      $region84: #{tpu_custom_call.1} parent=5 // pred_fallthru
        _
      %p1759 = scmp.le.s32.totalorder 2, %s27
      // Predicated region
      $region109: #{tpu_custom_call.1} parent=5 // pred_check
        %p1760 = pneg %p1759
      $region110: #{tpu_custom_call.1} parent=5 // pred_check_branch
        %1762 = sbr.rel (%p1760) target = $region112
      $region111: #{tpu_custom_call.1} parent=5 // pred_region
        %s1763 = ssub.s32 %s27, 2
        // Predicated region
        $region113: #{tpu_custom_call.1} parent=111 // pred_check
          %p1764 = pneg %p418
        $region114: #{tpu_custom_call.1} parent=111 // pred_check_branch
          %1766 = sbr.rel (%p1764) target = $region116
        $region115: #{tpu_custom_call.1} parent=111 // pred_region
          %s1767 = sand.u32 %s403, 1
          %s1768 = scalar_lea.sflag [#allocation8], %s1767
          %s1769 = sand.u32 %s403, 1
          %s1770 = smul.addr %s1769, 16
          %s1771 = scalar_lea.vmem [#allocation12], %s1770
          %1773 = dma.done %s1768, 256
        $region116: #{tpu_custom_call.1} parent=111 // pred_fallthru
          _
      $region112: #{tpu_custom_call.1} parent=5 // pred_fallthru
        _
    $region6: #{tpu_custom_call.1} parent=1 // loop_footer
      %s31 = sadd.s32 1, %s27
    $region7: #{tpu_custom_call.1} parent=1 // loop_footer_branch
      %26 = sbr.rel target = $region3
    $region8: #{tpu_custom_call.1} parent=1 // loop_exit
      _
    %1774 = vsyncpa [#allocation7], 1
    %s1775 = scalar_lea.sflag [#allocation7], 1
    %1776 = vsyncpa %s1775, 1
    %1777 = vsyncpa [#allocation10], 1
    %1778 = vsyncpa [#allocation8], 1
    %s1779 = scalar_lea.sflag [#allocation8], 1
    %1780 = vsyncpa %s1779, 1

</llo_original>
